<compile_context>
chip_gen: v6e
topology: v6e:2x2x1
jax: 0.10.0
libtpu: 0.0.40
codegen_flags: <defaults>
</compile_context>

<pallas_src>
import math
import numpy as np
import jax
import jax.numpy as jnp
from jax.experimental import pallas as pl
from jax.experimental.pallas import tpu as pltpu


# ----------------------------------------------------------------------
# Operator construction helpers (tiny, plain JAX glue) — mirror torch code.
# ----------------------------------------------------------------------
def make_base(dim):
    # torch.eye(D).unsqueeze(2): (dim, dim, 1) column basis vectors.
    return jnp.eye(dim, dtype=jnp.complex64)[:, :, None]


def Sx(j, k, base):
    return (jnp.kron(base[j - 1], base[k - 1].T)
            + jnp.kron(base[k - 1], base[j - 1].T)).astype(jnp.complex64)


def Sy(j, k, base):
    return (-1j * jnp.kron(base[j - 1], base[k - 1].T)
            + 1j * jnp.kron(base[k - 1], base[j - 1].T)).astype(jnp.complex64)


def Sz(j, k, base):
    # NOTE: mirrors the torch code exactly; calling with j == 0 divides by
    # zero there as well — do not use mtx_id=2 with j=0.
    f = (2.0 / (j * (j + 1))) ** 0.5
    s = 0.0
    for kk in range(0, j + 1):
        d = 1.0 if kk == j else 0.0
        s = s + ((-j) ** d) * jnp.kron(base[kk], base[kk].T)
    return (f * s).astype(jnp.complex64)


SIGMA = (Sx, Sy, Sz)


def expm_taylor(A, order=24, squarings=8):
    """Scaling-and-squaring Taylor matrix exponential for a tiny complex matrix
    (stands in for torch.matrix_exp; f32-accurate for ||A|| up to a few pi)."""
    A = A / (2.0 ** squarings)
    n = A.shape[0]
    E = jnp.eye(n, dtype=A.dtype)
    term = jnp.eye(n, dtype=A.dtype)
    for i in range(1, order + 1):
        term = term @ A / i
        E = E + term
    for _ in range(squarings):
        E = E @ E
    return E


# ----------------------------------------------------------------------
# Pallas kernel: contract the (dim, dim) complex gate against the middle
# qudit axis of one (dim, tn) lane tile, combining real/imag in-kernel.
# ----------------------------------------------------------------------
def _rot_kernel(mr_ref, mi_ref, xr_ref, xi_ref, or_ref, oi_ref):
    mr = mr_ref[...]
    mi = mi_ref[...]
    xr = xr_ref[...]
    xi = xi_ref[...]
    # Complex matmul as 4 small real MXU passes.  K = M = dim is tiny by
    # construction; the kernel is HBM-bound so MXU utilisation is irrelevant,
    # and Mosaic's f32 matmul path keeps full f32 accuracy for this tiny K.
    rr = jnp.dot(mr, xr, preferred_element_type=jnp.float32)
    ii = jnp.dot(mi, xi, preferred_element_type=jnp.float32)
    ir = jnp.dot(mi, xr, preferred_element_type=jnp.float32)
    ri = jnp.dot(mr, xi, preferred_element_type=jnp.float32)
    or_ref[...] = rr - ii
    oi_ref[...] = ir + ri


def _choose_lane_tile(C, dim, ne, max_lane_tile):
    """Pick the lane-tile width tn for (ne, dim, C) f32 planes."""
    # Keep the double-buffered working set (xr, xi, out_r, out_i blocks) under
    # ~8 MiB: safe vs v5e's 16 MiB default scoped VMEM and v7x's 64 MiB
    # physical VMEM, while keeping per-row DMA chunks large.
    vmem_budget = 8 * 1024 * 1024
    cols_budget = vmem_budget // (dim * 4 * 4 * 2)       # dtype * arrays * dbl-buf
    cap = min(max_lane_tile, cols_budget)
    cap = max(128, (cap // 128) * 128)
    if ne == 1 and C > 128:
        # Keep >= 2 lane tiles so both v7x TensorCores get work.
        half = -(-C // 2)
        half = ((half + 127) // 128) * 128
        cap = min(cap, max(128, half))
    if C <= cap:
        return C                      # full-extent lane block: no masking
    # Prefer a multiple-of-128 tile that divides C exactly (unmasked stores,
    # no padding); only give up if that would shrink the tile below ~cap/2.
    t = cap
    t_min = max(128, ((cap // 2) // 128) * 128)
    while t >= t_min:
        if C % t == 0:
            return t
        t -= 128
    return cap                        # ragged tail handled by Pallas masking


def apply_rot_pallas(mr, mi, xr, xi, *, max_lane_tile=32768):
    """out[e,i,c] = sum_j M[i,j] x[e,j,c] with M = mr + i*mi, x = xr + i*xi.

    mr, mi: (dim, dim) f32.  xr, xi: (ne, dim, C) f32.  Returns (out_r, out_i),
    each (ne, dim, C) f32, written in the same layout (no post-transpose)."""
    ne, dim, C = xr.shape
    tn = _choose_lane_tile(C, dim, ne, max_lane_tile)
    n_lane = -(-C // tn)
    grid = (ne, n_lane)

    m_spec = pl.BlockSpec((dim, dim), lambda e, t: (0, 0))         # VMEM-resident
    x_spec = pl.BlockSpec((None, dim, tn), lambda e, t: (e, 0, t))  # streamed

    flops = 4 * 2 * ne * dim * dim * C
    bytes_accessed = 4 * (2 * dim * dim + 4 * ne * dim * C)

    return pl.pallas_call(
        _rot_kernel,
        out_shape=(jax.ShapeDtypeStruct((ne, dim, C), jnp.float32),
                   jax.ShapeDtypeStruct((ne, dim, C), jnp.float32)),
        grid=grid,
        in_specs=[m_spec, m_spec, x_spec, x_spec],
        out_specs=(x_spec, x_spec),
        compiler_params=pltpu.CompilerParams(
            dimension_semantics=("parallel", "parallel")),
        cost_estimate=pl.CostEstimate(flops=flops, transcendentals=0,
                                      bytes_accessed=bytes_accessed),
    )(mr, mi, xr, xi)


# ----------------------------------------------------------------------
# JAX port of the `Rot` module (Kronecker structure exploited analytically).
# ----------------------------------------------------------------------
_SMALL_STATE_ELEMS = 32768   # below this (complex elems), skip Pallas entirely


class RotPallas:
    def __init__(self, mtx_id=0, j=0, k=1, index=0, dim=3, N=2,
                 key=jax.random.PRNGKey(0), max_lane_tile=32768):
        self.mtx_id, self.j, self.k = mtx_id, j, k
        self.index, self.dim, self.N = index, dim, N
        self.esq = index                      # qudits to the left
        self.dir = N - index - 1              # qudits to the right
        self.max_lane_tile = max_lane_tile
        base = make_base(dim)
        self.S = SIGMA[mtx_id](j, k, base).astype(jnp.complex64)
        # Parameter: angle ~ Uniform(0, 2*pi), deterministic via PRNG key.
        self.angle = jax.random.uniform(key, (1,), dtype=jnp.float32,
                                        minval=0.0, maxval=2.0 * math.pi)

    def _gate_matrix(self):
        theta = self.angle[0].astype(jnp.complex64)
        return expm_taylor(-0.5j * theta * self.S)        # (dim, dim) complex

    def __call__(self, x):
        squeeze = (x.ndim == 1)
        if squeeze:
            x = x[:, None]
        x = x.astype(jnp.complex64)
        D, B = x.shape
        ne = self.dim ** self.esq
        nd = self.dim ** self.dir
        C = nd * B
        M = self._gate_matrix()

        if D * B < _SMALL_STATE_ELEMS or C < 128:
            # Tiny problem (or too few lane columns): the pallas_call launch
            # and interface passes would dominate -> fused XLA einsum.
            # TODO(synk): a Pallas variant folding `ne` into lanes in-kernel
            # (XLU) would cover the large-D / C<128 corner without the wrapper
            # transpose it previously needed.
            out = jnp.einsum('ij,ejc->eic', M,
                             x.reshape(ne, self.dim, C)).reshape(D, B)
            return out[:, 0] if squeeze else out

        mr = jnp.real(M).astype(jnp.float32)
        mi = jnp.imag(M).astype(jnp.float32)
        # (D, B) -> (ne, dim, nd*B) is a contiguous (free) reshape; the planar
        # real/imag split is the only non-kernel HBM pass left.
        # TODO(synk): an interleaved-lane variant (complex64 viewed as f32
        # pairs + pltpu.roll pair-swap in-kernel) would remove it, but XLA's
        # bitcast does not support complex dtypes today.
        xr = jnp.real(x).reshape(ne, self.dim, C)
        xi = jnp.imag(x).reshape(ne, self.dim, C)

        out_r, out_i = apply_rot_pallas(mr, mi, xr, xi,
                                        max_lane_tile=self.max_lane_tile)
        out = jax.lax.complex(out_r, out_i).reshape(D, B)
        return out[:, 0] if squeeze else out


# ----------------------------------------------------------------------
# Plain-JAX dense reference (builds U explicitly, only for verification).
# ----------------------------------------------------------------------
def dense_reference(gate, x):
    M = gate._gate_matrix()
    U = jnp.kron(jnp.eye(gate.dim ** gate.esq, dtype=jnp.complex64),
                 jnp.kron(M, jnp.eye(gate.dim ** gate.dir, dtype=jnp.complex64)))
    return U @ x


if __name__ == "__main__":
    root = jax.random.PRNGKey(0)
    keys = jax.random.split(root, 12)

    def rand_state(kr, ki, D, B):
        return (jax.random.normal(kr, (D, B), dtype=jnp.float32)
                + 1j * jax.random.normal(ki, (D, B), dtype=jnp.float32)
                ).astype(jnp.complex64)

    # --- Test 1: tiny default problem -> fused einsum fast path ------------
    gate1 = RotPallas(mtx_id=0, j=0, k=1, index=0, dim=3, N=2, key=keys[0])
    x1 = rand_state(keys[1], keys[2], 3 ** 2, 8)          # D=9, B=8
    out1 = jax.block_until_ready(gate1(x1))
    np.testing.assert_allclose(np.asarray(out1),
                               np.asarray(dense_reference(gate1, x1)),
                               atol=1e-5, rtol=1e-5)

    # --- Test 2: Pallas path, grid (ne=9, 1), full-extent lane block -------
    gate2 = RotPallas(mtx_id=1, j=1, k=2, index=2, dim=3, N=6, key=keys[3])
    x2 = rand_state(keys[4], keys[5], 3 ** 6, 64)         # D=729, C=27*64=1728
    out2 = jax.block_until_ready(gate2(x2))
    np.testing.assert_allclose(np.asarray(out2),
                               np.asarray(dense_reference(gate2, x2)),
                               atol=1e-5, rtol=1e-5)

    # --- Test 3: Pallas path, lane tiling with an exact divisor tile -------
    gate3 = RotPallas(mtx_id=0, j=1, k=2, index=1, dim=3, N=6, key=keys[6],
                      max_lane_tile=1200)                 # -> tn=1152, grid (3, 9)
    x3 = rand_state(keys[7], keys[8], 3 ** 6, 128)        # D=729, C=81*128=10368
    out3 = jax.block_until_ready(gate3(x3))
    np.testing.assert_allclose(np.asarray(out3),
                               np.asarray(dense_reference(gate3, x3)),
                               atol=1e-5, rtol=1e-5)

    # --- Test 4: ne == 1 (index 0): lane split for v7x + masked ragged tail
    gate4 = RotPallas(mtx_id=1, j=1, k=3, index=0, dim=3, N=5, key=keys[9])
    x4 = rand_state(keys[10], keys[11], 3 ** 5, 200)      # D=243, C=81*200=16200
    out4 = jax.block_until_ready(gate4(x4))
    np.testing.assert_allclose(np.asarray(out4),
                               np.asarray(dense_reference(gate4, x4)),
                               atol=1e-5, rtol=1e-5)

    print("KERNEL_OK")
</pallas_src>

<mosaic_0001>
module attributes {stable_mosaic.version = 11 : i64} {
  func.func @_rot_kernel(%arg0: i32, %arg1: i32, %arg2: memref<3x3xf32, #tpu.memory_space<vmem>>, %arg3: memref<3x3xf32, #tpu.memory_space<vmem>>, %arg4: memref<1x3x1728xf32, #tpu.memory_space<vmem>>, %arg5: memref<1x3x1728xf32, #tpu.memory_space<vmem>>, %arg6: memref<1x3x1728xf32, #tpu.memory_space<vmem>>, %arg7: memref<1x3x1728xf32, #tpu.memory_space<vmem>>) attributes {dimension_semantics = [#tpu.dimension_semantics<parallel>, #tpu.dimension_semantics<parallel>], iteration_bounds = array<i64: 9, 1>, scalar_prefetch = 0 : i64, scratch_operands = 0 : i64, tpu.core_type = #tpu.core_type<tc>, window_params = [{pipeline_mode = #tpu.pipeline_mode<synchronous>, transform_indices = @transform_0, window_bounds = array<i64: 3, 3>}, {pipeline_mode = #tpu.pipeline_mode<synchronous>, transform_indices = @transform_1, window_bounds = array<i64: 3, 3>}, {transform_indices = @transform_2, window_bounds = array<i64: 1, 3, 1728>}, {transform_indices = @transform_3, window_bounds = array<i64: 1, 3, 1728>}, {transform_indices = @transform_4, window_bounds = array<i64: 1, 3, 1728>}, {transform_indices = @transform_5, window_bounds = array<i64: 1, 3, 1728>}]} {
    %c0 = arith.constant 0 : index
    %c0_0 = arith.constant 0 : index
    %0 = vector.load %arg2[%c0, %c0_0] : memref<3x3xf32, #tpu.memory_space<vmem>>, vector<3x3xf32>
    %c0_1 = arith.constant 0 : index
    %c0_2 = arith.constant 0 : index
    %1 = vector.load %arg3[%c0_1, %c0_2] : memref<3x3xf32, #tpu.memory_space<vmem>>, vector<3x3xf32>
    %c0_3 = arith.constant 0 : index
    %c0_4 = arith.constant 0 : index
    %c0_5 = arith.constant 0 : index
    %2 = vector.load %arg4[%c0_3, %c0_4, %c0_5] : memref<1x3x1728xf32, #tpu.memory_space<vmem>>, vector<1x3x1728xf32>
    %3 = vector.shape_cast %2 : vector<1x3x1728xf32> to vector<3x1728xf32>
    %c0_6 = arith.constant 0 : index
    %c0_7 = arith.constant 0 : index
    %c0_8 = arith.constant 0 : index
    %4 = vector.load %arg5[%c0_6, %c0_7, %c0_8] : memref<1x3x1728xf32, #tpu.memory_space<vmem>>, vector<1x3x1728xf32>
    %5 = vector.shape_cast %4 : vector<1x3x1728xf32> to vector<3x1728xf32>
    %cst = arith.constant dense<0.000000e+00> : vector<3x1728xf32>
    %6 = tpu.matmul %0, %3, %cst {dimension_numbers = #tpu.dot_dimension_numbers<[1], [0], [0], [1], [0, 0, 1, 1], [], []>} : vector<3x3xf32>, vector<3x1728xf32>, vector<3x1728xf32> -> vector<3x1728xf32>
    %cst_9 = arith.constant dense<0.000000e+00> : vector<3x1728xf32>
    %7 = tpu.matmul %1, %5, %cst_9 {dimension_numbers = #tpu.dot_dimension_numbers<[1], [0], [0], [1], [0, 0, 1, 1], [], []>} : vector<3x3xf32>, vector<3x1728xf32>, vector<3x1728xf32> -> vector<3x1728xf32>
    %cst_10 = arith.constant dense<0.000000e+00> : vector<3x1728xf32>
    %8 = tpu.matmul %1, %3, %cst_10 {dimension_numbers = #tpu.dot_dimension_numbers<[1], [0], [0], [1], [0, 0, 1, 1], [], []>} : vector<3x3xf32>, vector<3x1728xf32>, vector<3x1728xf32> -> vector<3x1728xf32>
    %cst_11 = arith.constant dense<0.000000e+00> : vector<3x1728xf32>
    %9 = tpu.matmul %0, %5, %cst_11 {dimension_numbers = #tpu.dot_dimension_numbers<[1], [0], [0], [1], [0, 0, 1, 1], [], []>} : vector<3x3xf32>, vector<3x1728xf32>, vector<3x1728xf32> -> vector<3x1728xf32>
    %10 = arith.subf %6, %7 : vector<3x1728xf32>
    %c0_12 = arith.constant 0 : index
    %c0_13 = arith.constant 0 : index
    %c0_14 = arith.constant 0 : index
    %11 = vector.load %arg6[%c0_12, %c0_13, %c0_14] : memref<1x3x1728xf32, #tpu.memory_space<vmem>>, vector<1x3x1728xf32>
    %12 = vector.shape_cast %11 : vector<1x3x1728xf32> to vector<3x1728xf32>
    %13 = vector.shape_cast %10 : vector<3x1728xf32> to vector<1x3x1728xf32>
    tpu.vector_store %arg6[%c0_12, %c0_13, %c0_14], %13 {strides = array<i32>} : memref<1x3x1728xf32, #tpu.memory_space<vmem>>, vector<1x3x1728xf32>,
    %14 = arith.addf %8, %9 : vector<3x1728xf32>
    %c0_15 = arith.constant 0 : index
    %c0_16 = arith.constant 0 : index
    %c0_17 = arith.constant 0 : index
    %15 = vector.load %arg7[%c0_15, %c0_16, %c0_17] : memref<1x3x1728xf32, #tpu.memory_space<vmem>>, vector<1x3x1728xf32>
    %16 = vector.shape_cast %15 : vector<1x3x1728xf32> to vector<3x1728xf32>
    %17 = vector.shape_cast %14 : vector<3x1728xf32> to vector<1x3x1728xf32>
    tpu.vector_store %arg7[%c0_15, %c0_16, %c0_17], %17 {strides = array<i32>} : memref<1x3x1728xf32, #tpu.memory_space<vmem>>, vector<1x3x1728xf32>,
    return
  }
  func.func @transform_0(%arg0: i32, %arg1: i32) -> (i32, i32) {
    %c0_i32 = arith.constant 0 : i32
    %c0_i32_0 = arith.constant 0 : i32
    %c0_i32_1 = arith.constant 0 : i32
    return %c0_i32, %c0_i32_0 : i32, i32
  }
  func.func @transform_1(%arg0: i32, %arg1: i32) -> (i32, i32) {
    %c0_i32 = arith.constant 0 : i32
    %c0_i32_0 = arith.constant 0 : i32
    %c0_i32_1 = arith.constant 0 : i32
    return %c0_i32, %c0_i32_0 : i32, i32
  }
  func.func @transform_2(%arg0: i32, %arg1: i32) -> (i32, i32, i32) {
    %c0_i32 = arith.constant 0 : i32
    %c0_i32_0 = arith.constant 0 : i32
    return %arg0, %c0_i32, %arg1 : i32, i32, i32
  }
  func.func @transform_3(%arg0: i32, %arg1: i32) -> (i32, i32, i32) {
    %c0_i32 = arith.constant 0 : i32
    %c0_i32_0 = arith.constant 0 : i32
    return %arg0, %c0_i32, %arg1 : i32, i32, i32
  }
  func.func @transform_4(%arg0: i32, %arg1: i32) -> (i32, i32, i32) {
    %c0_i32 = arith.constant 0 : i32
    %c0_i32_0 = arith.constant 0 : i32
    return %arg0, %c0_i32, %arg1 : i32, i32, i32
  }
  func.func @transform_5(%arg0: i32, %arg1: i32) -> (i32, i32, i32) {
    %c0_i32 = arith.constant 0 : i32
    %c0_i32_0 = arith.constant 0 : i32
    return %arg0, %c0_i32, %arg1 : i32, i32, i32
  }
}

</mosaic_0001>

<llo_original>
// kernel: tpu_custom_call.1
$region0: #{tpu_custom_call.1}
  #allocation0 [shape = 'u32[]', space=smem, size = 0x4, offset = 0x4, fixed_abs, tag = 'smem constant byte address 0x4 - core index']
  #allocation1 [shape = 'u32[144,128]{1,0:T(1,128)}', space=vmem, size = 0x12000, scoped, tag = 'internal scratch']
  %s0 = inlined_call_operand.hbm [shape: f32[3,3], index: 0, kind: input, shape index: {}]
  %s1 = inlined_call_operand.hbm [shape: f32[3,3], index: 1, kind: input, shape index: {}]
  %s2 = inlined_call_operand.hbm [shape: f32[9,3,1728], index: 2, kind: input, shape index: {}]
  %s3 = inlined_call_operand.hbm [shape: f32[9,3,1728], index: 3, kind: input, shape index: {}]
  %s4 = inlined_call_operand.hbm [shape: f32[9,3,1728], index: 4, kind: output, shape index: {0}]
  %s5 = inlined_call_operand.hbm [shape: f32[9,3,1728], index: 5, kind: output, shape index: {1}]
  %6 = xla_tuple %s4, %s5
  %s7 = sld [smem:[#allocation0]]
  $region73: #{tpu_custom_call.1} parent=0
    _
  %s9 = ssub.s32 1, %s7
  %s10 = scalar_select 0, %s9, %s7
  $region1: #{tpu_custom_call.1} parent=0
    #allocation2 [shape = 'u8[2048]{0}', space=vmem, size = 0x800, scoped, tag = 'input window, operand 0, single buffered']
    #allocation3 [shape = 's32[2]{0}', space=sflag, size = 0x8, scoped, tag = 'scoped memory for tpu_custom_call.1']
    #allocation4 [shape = 's32[2]{0}', space=sflag, size = 0x8, scoped, tag = 'scoped memory for tpu_custom_call.1']
    #allocation5 [shape = 'u8[2048]{0}', space=vmem, size = 0x800, scoped, tag = 'input window, operand 1, single buffered']
    #allocation6 [shape = 's32[1]{0}', space=sflag, size = 0x4, scoped, tag = 'scoped memory for tpu_custom_call.1']
    #allocation7 [shape = 'u8[57344]{0}', space=vmem, size = 0xe000, scoped, tag = 'input window, operand 2']
    #allocation8 [shape = 'u8[57344]{0}', space=vmem, size = 0xe000, scoped, tag = 'input window, operand 3']
    #allocation9 [shape = 'u8[57344]{0}', space=vmem, size = 0xe000, scoped, tag = 'output window, operand 0']
    #allocation10 [shape = 'u8[57344]{0}', space=vmem, size = 0xe000, scoped, tag = 'output window, operand 1']
    #allocation11 [shape = 's32[2]{0}', space=sflag, size = 0x8, scoped, tag = 'scoped memory for tpu_custom_call.1']
    %11 = vsyncpa [#allocation3], 0
    %12 = vsyncpa [#allocation6], 0
    %13 = vsyncpa [#allocation4], 0
    %s14 = scalar_lea.sflag [#allocation4], 1
    %15 = vsyncpa %s14, 0
    %16 = vsyncpa [#allocation11], 0
    %s17 = scalar_lea.sflag [#allocation11], 1
    %18 = vsyncpa %s17, 0
    loop: start=0, step=1, limit=11
    $region2: #{tpu_custom_call.1} parent=1 // loop_pre_header
      _
    $region3: #{tpu_custom_call.1} parent=1 // loop_header
      %s20 = sphi 0, %s24
      %p21 = scmp.ge.s32.totalorder %s20, 11
      %s27 = sphi 0, %s39
      %s28 = sphi 0, %s35
      %s29 = sphi 0, %s27
      %s30 = sphi 0, %s28
      %s31 = sphi 0, %s29
      %s32 = sphi 0, %s30
      %s40 = sphi 0, %s40
      %s42 = sphi 0, %s40
      %s43 = sphi 0, %s42
      %s57 = sphi 0, %s43
      %s61 = sphi 0, %s61
      %s63 = sphi 0, %s61
      %s64 = sphi 0, %s63
      %s78 = sphi 0, %s64
      %s86 = sphi 0, %s88
      %s89 = sphi 0, %s86
      %s90 = sphi 0, %s89
      %s106 = sphi 0, %s90
      %s114 = sphi 0, %s116
      %s117 = sphi 0, %s114
      %s118 = sphi 0, %s117
      %s134 = sphi 0, %s118
      %s142 = sphi 0, %s144
      %s145 = sphi 0, %s142
      %s146 = sphi 0, %s145
      %s162 = sphi 0, %s146
      %s170 = sphi 0, %s172
      %s173 = sphi 0, %s170
      %s174 = sphi 0, %s173
      %s190 = sphi 0, %s174
    $region4: #{tpu_custom_call.1} parent=1 // loop_header_branch
      %23 = sbr.rel (%p21) target = $region8
    $region5: #{tpu_custom_call.1} parent=1 // loop_body
      %s25 = ssub.s32 %s20, 1
      %s26 = ssub.s32 %s20, 2
      %s33 = sadd.s32 1, %s28
      %p34 = scmp.ge.s32.totalorder %s33, 1
      %s35 = scalar_select %p34, 0, %s33
      %s36 = sadd.s32 1, %s27
      %s37 = scalar_select %p34, %s36, %s27
      %p38 = scmp.ge.s32.totalorder %s37, 9
      %s39 = scalar_select %p38, 0, %s37
      %s41 = sadd.s32 %s40, 1
      %p44 = scmp.eq.s32.totalorder %s20, 8
      %p45 = scmp.ne.s32.totalorder %s40, %s42
      %p46 = scmp.eq.s32.totalorder %s20, 0
      %p47 = por %p45, %p46
      %p48 = scmp.ne.s32.totalorder %s40, %s42
      %p49 = scmp.eq.s32.totalorder %s25, 8
      %p50 = por %p48, %p49
      %p51 = scmp.ne.s32.totalorder %s42, %s43
      %p52 = scmp.eq.s32.totalorder %s25, 0
      %p53 = por %p51, %p52
      %p54 = scmp.ne.s32.totalorder %s42, %s43
      %p55 = scmp.eq.s32.totalorder %s26, 8
      %p56 = por %p54, %p55
      %p58 = scmp.ne.s32.totalorder %s43, %s57
      %p59 = scmp.eq.s32.totalorder %s26, 0
      %p60 = por %p58, %p59
      %s62 = sadd.s32 %s61, 1
      %p65 = scmp.eq.s32.totalorder %s20, 8
      %p66 = scmp.ne.s32.totalorder %s61, %s63
      %p67 = scmp.eq.s32.totalorder %s20, 0
      %p68 = por %p66, %p67
      %p69 = scmp.ne.s32.totalorder %s61, %s63
      %p70 = scmp.eq.s32.totalorder %s25, 8
      %p71 = por %p69, %p70
      %p72 = scmp.ne.s32.totalorder %s63, %s64
      %p73 = scmp.eq.s32.totalorder %s25, 0
      %p74 = por %p72, %p73
      %p75 = scmp.ne.s32.totalorder %s63, %s64
      %p76 = scmp.eq.s32.totalorder %s26, 8
      %p77 = por %p75, %p76
      %p79 = scmp.ne.s32.totalorder %s64, %s78
      %p80 = scmp.eq.s32.totalorder %s26, 0
      %p81 = por %p79, %p80
      %s82 = ssub.s32 %s27, %s39
      %s83 = ssub.s32 %s28, %s35
      %s84 = sor.u32 %s82, %s83
      %p85 = scmp.eq.s32.totalorder %s84, 0
      %s87 = sadd.s32 %s86, 1
      %s88 = scalar_select %p85, %s86, %s87
      %p91 = pneg %p85
      %p92 = scmp.eq.s32.totalorder %s20, 8
      %p93 = por %p91, %p92
      %p94 = scmp.ne.s32.totalorder %s86, %s89
      %p95 = scmp.eq.s32.totalorder %s20, 0
      %p96 = por %p94, %p95
      %p97 = scmp.ne.s32.totalorder %s86, %s89
      %p98 = scmp.eq.s32.totalorder %s25, 8
      %p99 = por %p97, %p98
      %p100 = scmp.ne.s32.totalorder %s89, %s90
      %p101 = scmp.eq.s32.totalorder %s25, 0
      %p102 = por %p100, %p101
      %p103 = scmp.ne.s32.totalorder %s89, %s90
      %p104 = scmp.eq.s32.totalorder %s26, 8
      %p105 = por %p103, %p104
      %p107 = scmp.ne.s32.totalorder %s90, %s106
      %p108 = scmp.eq.s32.totalorder %s26, 0
      %p109 = por %p107, %p108
      %s110 = ssub.s32 %s27, %s39
      %s111 = ssub.s32 %s28, %s35
      %s112 = sor.u32 %s110, %s111
      %p113 = scmp.eq.s32.totalorder %s112, 0
      %s115 = sadd.s32 %s114, 1
      %s116 = scalar_select %p113, %s114, %s115
      %p119 = pneg %p113
      %p120 = scmp.eq.s32.totalorder %s20, 8
      %p121 = por %p119, %p120
      %p122 = scmp.ne.s32.totalorder %s114, %s117
      %p123 = scmp.eq.s32.totalorder %s20, 0
      %p124 = por %p122, %p123
      %p125 = scmp.ne.s32.totalorder %s114, %s117
      %p126 = scmp.eq.s32.totalorder %s25, 8
      %p127 = por %p125, %p126
      %p128 = scmp.ne.s32.totalorder %s117, %s118
      %p129 = scmp.eq.s32.totalorder %s25, 0
      %p130 = por %p128, %p129
      %p131 = scmp.ne.s32.totalorder %s117, %s118
      %p132 = scmp.eq.s32.totalorder %s26, 8
      %p133 = por %p131, %p132
      %p135 = scmp.ne.s32.totalorder %s118, %s134
      %p136 = scmp.eq.s32.totalorder %s26, 0
      %p137 = por %p135, %p136
      %s138 = ssub.s32 %s27, %s39
      %s139 = ssub.s32 %s28, %s35
      %s140 = sor.u32 %s138, %s139
      %p141 = scmp.eq.s32.totalorder %s140, 0
      %s143 = sadd.s32 %s142, 1
      %s144 = scalar_select %p141, %s142, %s143
      %p147 = pneg %p141
      %p148 = scmp.eq.s32.totalorder %s20, 8
      %p149 = por %p147, %p148
      %p150 = scmp.ne.s32.totalorder %s142, %s145
      %p151 = scmp.eq.s32.totalorder %s20, 0
      %p152 = por %p150, %p151
      %p153 = scmp.ne.s32.totalorder %s142, %s145
      %p154 = scmp.eq.s32.totalorder %s25, 8
      %p155 = por %p153, %p154
      %p156 = scmp.ne.s32.totalorder %s145, %s146
      %p157 = scmp.eq.s32.totalorder %s25, 0
      %p158 = por %p156, %p157
      %p159 = scmp.ne.s32.totalorder %s145, %s146
      %p160 = scmp.eq.s32.totalorder %s26, 8
      %p161 = por %p159, %p160
      %p163 = scmp.ne.s32.totalorder %s146, %s162
      %p164 = scmp.eq.s32.totalorder %s26, 0
      %p165 = por %p163, %p164
      %s166 = ssub.s32 %s27, %s39
      %s167 = ssub.s32 %s28, %s35
      %s168 = sor.u32 %s166, %s167
      %p169 = scmp.eq.s32.totalorder %s168, 0
      %s171 = sadd.s32 %s170, 1
      %s172 = scalar_select %p169, %s170, %s171
      %p175 = pneg %p169
      %p176 = scmp.eq.s32.totalorder %s20, 8
      %p177 = por %p175, %p176
      %p178 = scmp.ne.s32.totalorder %s170, %s173
      %p179 = scmp.eq.s32.totalorder %s20, 0
      %p180 = por %p178, %p179
      %p181 = scmp.ne.s32.totalorder %s170, %s173
      %p182 = scmp.eq.s32.totalorder %s25, 8
      %p183 = por %p181, %p182
      %p184 = scmp.ne.s32.totalorder %s173, %s174
      %p185 = scmp.eq.s32.totalorder %s25, 0
      %p186 = por %p184, %p185
      %p187 = scmp.ne.s32.totalorder %s173, %s174
      %p188 = scmp.eq.s32.totalorder %s26, 8
      %p189 = por %p187, %p188
      %p191 = scmp.ne.s32.totalorder %s174, %s190
      %p192 = scmp.eq.s32.totalorder %s26, 0
      %p193 = por %p191, %p192
      %p194 = scmp.le.s32.totalorder 1, %s20
      %p195 = scmp.lt.s32.totalorder %s20, 10
      %p196 = pnand %p194, %p195
      %p197 = pneg %p196
      // Predicated region
      $region9: #{tpu_custom_call.1} parent=5 // pred_check
        _
      $region10: #{tpu_custom_call.1} parent=5 // pred_check_branch
        %199 = sbr.rel (%p196) target = $region12
      $region11: #{tpu_custom_call.1} parent=5 // pred_region
        %s200 = ssub.s32 %s20, 1
        // Predicated region
        $region13: #{tpu_custom_call.1} parent=11 // pred_check
          %p201 = pneg %p53
        $region14: #{tpu_custom_call.1} parent=11 // pred_check_branch
          %203 = sbr.rel (%p201) target = $region16
        $region15: #{tpu_custom_call.1} parent=11 // pred_region
          %s205 = ssub.s32 64, 64
          %206 = vsyncadd [#allocation3], %s205
          %s208 = sshll.u32 [#allocation2], 4
          %s209 = int_to_ptr.vmem [resolvable:$true] %s208
          %211 = dma.hbm_to_vmem [thread:$0]  %s0, 64, %s209, [#allocation3]
        $region16: #{tpu_custom_call.1} parent=11 // pred_fallthru
          _
        // Predicated region
        $region17: #{tpu_custom_call.1} parent=11 // pred_check
          %p212 = pneg %p74
        $region18: #{tpu_custom_call.1} parent=11 // pred_check_branch
          %214 = sbr.rel (%p212) target = $region20
        $region19: #{tpu_custom_call.1} parent=11 // pred_region
          %s216 = ssub.s32 64, 64
          %217 = vsyncadd [#allocation6], %s216
          %s219 = sshll.u32 [#allocation5], 4
          %s220 = int_to_ptr.vmem [resolvable:$true] %s219
          %222 = dma.hbm_to_vmem [thread:$0]  %s1, 64, %s220, [#allocation6]
        $region20: #{tpu_custom_call.1} parent=11 // pred_fallthru
          _
      $region12: #{tpu_custom_call.1} parent=5 // pred_fallthru
        _
      %p223 = scmp.lt.s32.totalorder %s20, 9
      // Predicated region
      $region21: #{tpu_custom_call.1} parent=5 // pred_check
        %p224 = pneg %p223
      $region22: #{tpu_custom_call.1} parent=5 // pred_check_branch
        %226 = sbr.rel (%p224) target = $region24
      $region23: #{tpu_custom_call.1} parent=5 // pred_region
        // Predicated region
        $region25: #{tpu_custom_call.1} parent=23 // pred_check
          %p227 = pneg %p96
        $region26: #{tpu_custom_call.1} parent=23 // pred_check_branch
          %229 = sbr.rel (%p227) target = $region28
        $region27: #{tpu_custom_call.1} parent=23 // pred_region
          %s230 = sand.u32 %s20, 1
          %s231 = scalar_lea.sflag [#allocation3], %s230
          %s232 = sand.u32 %s86, 1
          %s233 = smul.addr %s232, 56
          %s234 = scalar_lea.vmem [#allocation7], %s233
          %s235 = smul.u32 14, %s28
          %s237 = ssub.s32 896, 896
          %238 = vsyncadd %s231, %s237
          %s239 = smul.addr %s27, 14
          %s240 = sadd.s32 %s235, %s239
          %s241 = smul.addr %s240, 64
          %s242 = scalar_lea.hbm %s2, %s241
          %s244 = sshll.u32 %s234, 4
          %s245 = int_to_ptr.vmem [resolvable:$true] %s244
          %247 = dma.hbm_to_vmem [thread:$0]  %s242, 896, %s245, %s231
        $region28: #{tpu_custom_call.1} parent=23 // pred_fallthru
          _
        // Predicated region
        $region29: #{tpu_custom_call.1} parent=23 // pred_check
          %p248 = pneg %p124
        $region30: #{tpu_custom_call.1} parent=23 // pred_check_branch
          %250 = sbr.rel (%p248) target = $region32
        $region31: #{tpu_custom_call.1} parent=23 // pred_region
          %s251 = sand.u32 %s20, 1
          %s252 = scalar_lea.sflag [#allocation3], %s251
          %s253 = sand.u32 %s114, 1
          %s254 = smul.addr %s253, 56
          %s255 = scalar_lea.vmem [#allocation8], %s254
          %s256 = smul.u32 14, %s28
          %s258 = ssub.s32 896, 896
          %259 = vsyncadd %s252, %s258
          %s260 = smul.addr %s27, 14
          %s261 = sadd.s32 %s256, %s260
          %s262 = smul.addr %s261, 64
          %s263 = scalar_lea.hbm %s3, %s262
          %s265 = sshll.u32 %s255, 4
          %s266 = int_to_ptr.vmem [resolvable:$true] %s265
          %268 = dma.hbm_to_vmem [thread:$0]  %s263, 896, %s266, %s252
        $region32: #{tpu_custom_call.1} parent=23 // pred_fallthru
          _
      $region24: #{tpu_custom_call.1} parent=5 // pred_fallthru
        _
      %p269 = scmp.le.s32.totalorder 1, %s20
      %p270 = scmp.lt.s32.totalorder %s20, 10
      %p271 = pnand %p269, %p270
      %p272 = pneg %p271
      // Predicated region
      $region33: #{tpu_custom_call.1} parent=5 // pred_check
        _
      $region34: #{tpu_custom_call.1} parent=5 // pred_check_branch
        %274 = sbr.rel (%p271) target = $region36
      $region35: #{tpu_custom_call.1} parent=5 // pred_region
        %s275 = ssub.s32 %s20, 1
        // Predicated region
        $region37: #{tpu_custom_call.1} parent=35 // pred_check
          %p276 = pneg %p53
        $region38: #{tpu_custom_call.1} parent=35 // pred_check_branch
          %278 = sbr.rel (%p276) target = $region40
        $region39: #{tpu_custom_call.1} parent=35 // pred_region
          %279 = dma.done [#allocation3], 64
        $region40: #{tpu_custom_call.1} parent=35 // pred_fallthru
          _
        // Predicated region
        $region41: #{tpu_custom_call.1} parent=35 // pred_check
          %p280 = pneg %p74
        $region42: #{tpu_custom_call.1} parent=35 // pred_check_branch
          %282 = sbr.rel (%p280) target = $region44
        $region43: #{tpu_custom_call.1} parent=35 // pred_region
          %283 = dma.done [#allocation6], 64
        $region44: #{tpu_custom_call.1} parent=35 // pred_fallthru
          _
        %s284 = sand.u32 %s25, 1
        %s285 = scalar_lea.sflag [#allocation3], %s284
        %s286 = sand.u32 %s89, 1
        %s287 = smul.addr %s286, 56
        %s288 = scalar_lea.vmem [#allocation7], %s287
        // Predicated region
        $region45: #{tpu_custom_call.1} parent=35 // pred_check
          %p289 = pneg %p102
        $region46: #{tpu_custom_call.1} parent=35 // pred_check_branch
          %291 = sbr.rel (%p289) target = $region48
        $region47: #{tpu_custom_call.1} parent=35 // pred_region
          %292 = dma.done %s285, 896
        $region48: #{tpu_custom_call.1} parent=35 // pred_fallthru
          _
        %s293 = sand.u32 %s25, 1
        %s294 = scalar_lea.sflag [#allocation3], %s293
        %s295 = sand.u32 %s117, 1
        %s296 = smul.addr %s295, 56
        %s297 = scalar_lea.vmem [#allocation8], %s296
        // Predicated region
        $region49: #{tpu_custom_call.1} parent=35 // pred_check
          %p298 = pneg %p130
        $region50: #{tpu_custom_call.1} parent=35 // pred_check_branch
          %300 = sbr.rel (%p298) target = $region52
        $region51: #{tpu_custom_call.1} parent=35 // pred_region
          %301 = dma.done %s294, 896
        $region52: #{tpu_custom_call.1} parent=35 // pred_fallthru
          _
        %p302 = pneg %p53
        %p303 = pneg %p50
        %p304 = pneg %p74
        %p305 = pneg %p71
        %s306 = sand.u32 %s25, 1
        %s307 = scalar_lea.sflag [#allocation3], %s306
        %s308 = sand.u32 %s89, 1
        %s309 = smul.addr %s308, 56
        %s310 = scalar_lea.vmem [#allocation7], %s309
        %p311 = pneg %p102
        %p312 = pneg %p99
        %s313 = sand.u32 %s25, 1
        %s314 = scalar_lea.sflag [#allocation3], %s313
        %s315 = sand.u32 %s117, 1
        %s316 = smul.addr %s315, 56
        %s317 = scalar_lea.vmem [#allocation8], %s316
        %p318 = pneg %p130
        %p319 = pneg %p127
        %p320 = pneg %p158
        %p321 = pneg %p155
        %s322 = sand.u32 %s145, 1
        %s323 = scalar_lea.sflag [#allocation4], %s322
        %s324 = sand.u32 %s145, 1
        %s325 = smul.addr %s324, 56
        %s326 = scalar_lea.vmem [#allocation9], %s325
        %p327 = pneg %p186
        %p328 = pneg %p183
        %s329 = sand.u32 %s173, 1
        %s330 = scalar_lea.sflag [#allocation11], %s329
        %s331 = sand.u32 %s173, 1
        %s332 = smul.addr %s331, 56
        %s333 = scalar_lea.vmem [#allocation10], %s332
        %s334 = smul.u32 14, %s30
        %s335 = smul.u32 14, %s30
        %s336 = smul.u32 14, %s30
        %s337 = smul.u32 14, %s30
        %v338 = vld [vmem:[#allocation2] sm:$0x7]
        %v339 = vld [vmem:[#allocation5] sm:$0x7]
        %v340 = vld [vmem:[%s288] sm:$0x77]
        %v341 = vld [vmem:[%s288 + $0x8] sm:$0x77]
        %v342 = vld [vmem:[%s288 + $0x10] sm:$0x77]
        %v343 = vld [vmem:[%s288 + $0x18] sm:$0x77]
        %v344 = vld [vmem:[%s288 + $0x20] sm:$0x77]
        %v345 = vld [vmem:[%s288 + $0x28] sm:$0x77]
        %v346 = vld [vmem:[%s288 + $0x30] sm:$0x77]
        %v347 = vld [vmem:[%s297] sm:$0x77]
        %v348 = vld [vmem:[%s297 + $0x8] sm:$0x77]
        %v349 = vld [vmem:[%s297 + $0x10] sm:$0x77]
        %v350 = vld [vmem:[%s297 + $0x18] sm:$0x77]
        %v351 = vld [vmem:[%s297 + $0x20] sm:$0x77]
        %v352 = vld [vmem:[%s297 + $0x28] sm:$0x77]
        %v353 = vld [vmem:[%s297 + $0x30] sm:$0x77]
        %v361 = vcombine.high %v340, %v340
        %v362 = vcombine.high %v341, %v341
        %v363 = vcombine.high %v342, %v342
        %v364 = vcombine.high %v343, %v343
        %v365 = vcombine.high %v344, %v344
        %v366 = vcombine.high %v345, %v345
        %v367 = vcombine.high %v346, %v346
        %vm368 = vcmask 23552
        %v370 = vsel %vm368, %v338, 0
        %vm372 = vcmask 1042432
        %v373 = vsel %vm372, %v340, 0
        %v375 = vsel %vm372, %v361, 0
        %v377 = vsel %vm372, %v341, 0
        %v379 = vsel %vm372, %v362, 0
        %v381 = vsel %vm372, %v342, 0
        %v383 = vsel %vm372, %v363, 0
        %v385 = vsel %vm372, %v343, 0
        %v387 = vsel %vm372, %v364, 0
        %v389 = vsel %vm372, %v344, 0
        %v391 = vsel %vm372, %v365, 0
        %v393 = vsel %vm372, %v345, 0
        %v395 = vsel %vm372, %v366, 0
        %v397 = vsel %vm372, %v346, 0
        %v399 = vsel %vm372, %v367, 0
        %401 = vmatprep.subr.mxu0 0.0
        %402 = vmatpush1.msra.mxu0 0.0
        %403 = vmatprep.subr.mxu0 0.0
        %404 = vmatpush1.msra.mxu0 0.0
        %405 = vmatprep.subr.mxu0 0.0
        %406 = vmatpush1.msra.mxu0 0.0
        %407 = vmatprep.subr.mxu0 0.0
        %408 = vmatpush1.msra.mxu0 0.0
        %409 = vmatprep.subr.mxu0 0.0
        %410 = vmatpush1.msra.mxu0 0.0
        %411 = vmatprep.subr.mxu0 0.0
        %412 = vmatpush1.msra.mxu0 0.0
        %413 = vmatprep.subr.mxu0 0.0
        %414 = vmatpush1.msra.mxu0 0.0
        %415 = vmatprep.subr.mxu0 0.0
        %416 = vmatpush1.msra.mxu0 0.0
        %417 = vmatprep.subr.mxu0 0.0
        %418 = vmatpush1.msra.mxu0 0.0
        %419 = vmatprep.subr.mxu0 0.0
        %420 = vmatpush1.msra.mxu0 0.0
        %421 = vmatprep.subr.mxu0 0.0
        %422 = vmatpush1.msra.mxu0 0.0
        %423 = vmatprep.subr.mxu0 0.0
        %424 = vmatpush1.msra.mxu0 0.0
        %425 = vmatprep.subr.mxu0 0.0
        %426 = vmatpush1.msra.mxu0 0.0
        %427 = vmatprep.subr.mxu0 0.0
        %428 = vmatpush1.msra.mxu0 0.0
        %429 = vmatprep.subr.mxu0 0.0
        %430 = vmatpush1.msra.mxu0 0.0
        %431 = vmatprep.subr.mxu0 %v375
        %432 = vmatpush1.msra.mxu0 %v373
        %433 = vmatprep.subr.mxu0 0.0
        %434 = vmatpush2.msra.mxu0 0.0
        %435 = vmatprep.subr.mxu0 0.0
        %436 = vmatpush2.msra.mxu0 0.0
        %437 = vmatprep.subr.mxu0 0.0
        %438 = vmatpush2.msra.mxu0 0.0
        %439 = vmatprep.subr.mxu0 0.0
        %440 = vmatpush2.msra.mxu0 0.0
        %441 = vmatprep.subr.mxu0 0.0
        %442 = vmatpush2.msra.mxu0 0.0
        %443 = vmatprep.subr.mxu0 0.0
        %444 = vmatpush2.msra.mxu0 0.0
        %445 = vmatprep.subr.mxu0 0.0
        %446 = vmatpush2.msra.mxu0 0.0
        %447 = vmatprep.subr.mxu0 0.0
        %448 = vmatpush2.msra.mxu0 0.0
        %449 = vmatprep.subr.mxu0 0.0
        %450 = vmatpush2.msra.mxu0 0.0
        %451 = vmatprep.subr.mxu0 0.0
        %452 = vmatpush2.msra.mxu0 0.0
        %453 = vmatprep.subr.mxu0 0.0
        %454 = vmatpush2.msra.mxu0 0.0
        %455 = vmatprep.subr.mxu0 0.0
        %456 = vmatpush2.msra.mxu0 0.0
        %457 = vmatprep.subr.mxu0 0.0
        %458 = vmatpush2.msra.mxu0 0.0
        %459 = vmatprep.subr.mxu0 0.0
        %460 = vmatpush2.msra.mxu0 0.0
        %461 = vmatprep.subr.mxu0 0.0
        %462 = vmatpush2.msra.mxu0 0.0
        %463 = vmatprep.subr.mxu0 0.0
        %464 = vmatpush2.msra.mxu0 0.0
        %465 = vmatprep.mubr.f32.mxu0 0.0
        %466 = vmatmul.mubr.f32.gmra.mxu0 %v370
        %v467 = vpop.f32.mrf.mxu0
        %v468 = vadd.f32 0.0, %v467
        %v469 = vpop.f32.mrf.mxu0
        %v470 = vadd.f32 0.0, %v469
        %471 = vdwg.mxu0
        %472 = vmatprep.subr.mxu0 0.0
        %473 = vmatpush1.msra.mxu0 0.0
        %474 = vmatprep.subr.mxu0 0.0
        %475 = vmatpush1.msra.mxu0 0.0
        %476 = vmatprep.subr.mxu0 0.0
        %477 = vmatpush1.msra.mxu0 0.0
        %478 = vmatprep.subr.mxu0 0.0
        %479 = vmatpush1.msra.mxu0 0.0
        %480 = vmatprep.subr.mxu0 0.0
        %481 = vmatpush1.msra.mxu0 0.0
        %482 = vmatprep.subr.mxu0 0.0
        %483 = vmatpush1.msra.mxu0 0.0
        %484 = vmatprep.subr.mxu0 0.0
        %485 = vmatpush1.msra.mxu0 0.0
        %486 = vmatprep.subr.mxu0 0.0
        %487 = vmatpush1.msra.mxu0 0.0
        %488 = vmatprep.subr.mxu0 0.0
        %489 = vmatpush1.msra.mxu0 0.0
        %490 = vmatprep.subr.mxu0 0.0
        %491 = vmatpush1.msra.mxu0 0.0
        %492 = vmatprep.subr.mxu0 0.0
        %493 = vmatpush1.msra.mxu0 0.0
        %494 = vmatprep.subr.mxu0 0.0
        %495 = vmatpush1.msra.mxu0 0.0
        %496 = vmatprep.subr.mxu0 0.0
        %497 = vmatpush1.msra.mxu0 0.0
        %498 = vmatprep.subr.mxu0 0.0
        %499 = vmatpush1.msra.mxu0 0.0
        %500 = vmatprep.subr.mxu0 0.0
        %501 = vmatpush1.msra.mxu0 0.0
        %502 = vmatprep.subr.mxu0 %v379
        %503 = vmatpush1.msra.mxu0 %v377
        %504 = vmatprep.subr.mxu0 0.0
        %505 = vmatpush2.msra.mxu0 0.0
        %506 = vmatprep.subr.mxu0 0.0
        %507 = vmatpush2.msra.mxu0 0.0
        %508 = vmatprep.subr.mxu0 0.0
        %509 = vmatpush2.msra.mxu0 0.0
        %510 = vmatprep.subr.mxu0 0.0
        %511 = vmatpush2.msra.mxu0 0.0
        %512 = vmatprep.subr.mxu0 0.0
        %513 = vmatpush2.msra.mxu0 0.0
        %514 = vmatprep.subr.mxu0 0.0
        %515 = vmatpush2.msra.mxu0 0.0
        %516 = vmatprep.subr.mxu0 0.0
        %517 = vmatpush2.msra.mxu0 0.0
        %518 = vmatprep.subr.mxu0 0.0
        %519 = vmatpush2.msra.mxu0 0.0
        %520 = vmatprep.subr.mxu0 0.0
        %521 = vmatpush2.msra.mxu0 0.0
        %522 = vmatprep.subr.mxu0 0.0
        %523 = vmatpush2.msra.mxu0 0.0
        %524 = vmatprep.subr.mxu0 0.0
        %525 = vmatpush2.msra.mxu0 0.0
        %526 = vmatprep.subr.mxu0 0.0
        %527 = vmatpush2.msra.mxu0 0.0
        %528 = vmatprep.subr.mxu0 0.0
        %529 = vmatpush2.msra.mxu0 0.0
        %530 = vmatprep.subr.mxu0 0.0
        %531 = vmatpush2.msra.mxu0 0.0
        %532 = vmatprep.subr.mxu0 0.0
        %533 = vmatpush2.msra.mxu0 0.0
        %534 = vmatprep.subr.mxu0 0.0
        %535 = vmatpush2.msra.mxu0 0.0
        %536 = vmatprep.mubr.f32.mxu0 0.0
        %537 = vmatmul.mubr.f32.gmra.mxu0 %v370
        %v538 = vpop.f32.mrf.mxu0
        %v539 = vadd.f32 0.0, %v538
        %v540 = vpop.f32.mrf.mxu0
        %v541 = vadd.f32 0.0, %v540
        %542 = vdwg.mxu0
        %543 = vmatprep.subr.mxu0 0.0
        %544 = vmatpush1.msra.mxu0 0.0
        %545 = vmatprep.subr.mxu0 0.0
        %546 = vmatpush1.msra.mxu0 0.0
        %547 = vmatprep.subr.mxu0 0.0
        %548 = vmatpush1.msra.mxu0 0.0
        %549 = vmatprep.subr.mxu0 0.0
        %550 = vmatpush1.msra.mxu0 0.0
        %551 = vmatprep.subr.mxu0 0.0
        %552 = vmatpush1.msra.mxu0 0.0
        %553 = vmatprep.subr.mxu0 0.0
        %554 = vmatpush1.msra.mxu0 0.0
        %555 = vmatprep.subr.mxu0 0.0
        %556 = vmatpush1.msra.mxu0 0.0
        %557 = vmatprep.subr.mxu0 0.0
        %558 = vmatpush1.msra.mxu0 0.0
        %559 = vmatprep.subr.mxu0 0.0
        %560 = vmatpush1.msra.mxu0 0.0
        %561 = vmatprep.subr.mxu0 0.0
        %562 = vmatpush1.msra.mxu0 0.0
        %563 = vmatprep.subr.mxu0 0.0
        %564 = vmatpush1.msra.mxu0 0.0
        %565 = vmatprep.subr.mxu0 0.0
        %566 = vmatpush1.msra.mxu0 0.0
        %567 = vmatprep.subr.mxu0 0.0
        %568 = vmatpush1.msra.mxu0 0.0
        %569 = vmatprep.subr.mxu0 0.0
        %570 = vmatpush1.msra.mxu0 0.0
        %571 = vmatprep.subr.mxu0 0.0
        %572 = vmatpush1.msra.mxu0 0.0
        %573 = vmatprep.subr.mxu0 %v383
        %574 = vmatpush1.msra.mxu0 %v381
        %575 = vmatprep.subr.mxu0 0.0
        %576 = vmatpush2.msra.mxu0 0.0
        %577 = vmatprep.subr.mxu0 0.0
        %578 = vmatpush2.msra.mxu0 0.0
        %579 = vmatprep.subr.mxu0 0.0
        %580 = vmatpush2.msra.mxu0 0.0
        %581 = vmatprep.subr.mxu0 0.0
        %582 = vmatpush2.msra.mxu0 0.0
        %583 = vmatprep.subr.mxu0 0.0
        %584 = vmatpush2.msra.mxu0 0.0
        %585 = vmatprep.subr.mxu0 0.0
        %586 = vmatpush2.msra.mxu0 0.0
        %587 = vmatprep.subr.mxu0 0.0
        %588 = vmatpush2.msra.mxu0 0.0
        %589 = vmatprep.subr.mxu0 0.0
        %590 = vmatpush2.msra.mxu0 0.0
        %591 = vmatprep.subr.mxu0 0.0
        %592 = vmatpush2.msra.mxu0 0.0
        %593 = vmatprep.subr.mxu0 0.0
        %594 = vmatpush2.msra.mxu0 0.0
        %595 = vmatprep.subr.mxu0 0.0
        %596 = vmatpush2.msra.mxu0 0.0
        %597 = vmatprep.subr.mxu0 0.0
        %598 = vmatpush2.msra.mxu0 0.0
        %599 = vmatprep.subr.mxu0 0.0
        %600 = vmatpush2.msra.mxu0 0.0
        %601 = vmatprep.subr.mxu0 0.0
        %602 = vmatpush2.msra.mxu0 0.0
        %603 = vmatprep.subr.mxu0 0.0
        %604 = vmatpush2.msra.mxu0 0.0
        %605 = vmatprep.subr.mxu0 0.0
        %606 = vmatpush2.msra.mxu0 0.0
        %607 = vmatprep.mubr.f32.mxu0 0.0
        %608 = vmatmul.mubr.f32.gmra.mxu0 %v370
        %v609 = vpop.f32.mrf.mxu0
        %v610 = vadd.f32 0.0, %v609
        %v611 = vpop.f32.mrf.mxu0
        %v612 = vadd.f32 0.0, %v611
        %613 = vdwg.mxu0
        %614 = vmatprep.subr.mxu0 0.0
        %615 = vmatpush1.msra.mxu0 0.0
        %616 = vmatprep.subr.mxu0 0.0
        %617 = vmatpush1.msra.mxu0 0.0
        %618 = vmatprep.subr.mxu0 0.0
        %619 = vmatpush1.msra.mxu0 0.0
        %620 = vmatprep.subr.mxu0 0.0
        %621 = vmatpush1.msra.mxu0 0.0
        %622 = vmatprep.subr.mxu0 0.0
        %623 = vmatpush1.msra.mxu0 0.0
        %624 = vmatprep.subr.mxu0 0.0
        %625 = vmatpush1.msra.mxu0 0.0
        %626 = vmatprep.subr.mxu0 0.0
        %627 = vmatpush1.msra.mxu0 0.0
        %628 = vmatprep.subr.mxu0 0.0
        %629 = vmatpush1.msra.mxu0 0.0
        %630 = vmatprep.subr.mxu0 0.0
        %631 = vmatpush1.msra.mxu0 0.0
        %632 = vmatprep.subr.mxu0 0.0
        %633 = vmatpush1.msra.mxu0 0.0
        %634 = vmatprep.subr.mxu0 0.0
        %635 = vmatpush1.msra.mxu0 0.0
        %636 = vmatprep.subr.mxu0 0.0
        %637 = vmatpush1.msra.mxu0 0.0
        %638 = vmatprep.subr.mxu0 0.0
        %639 = vmatpush1.msra.mxu0 0.0
        %640 = vmatprep.subr.mxu0 0.0
        %641 = vmatpush1.msra.mxu0 0.0
        %642 = vmatprep.subr.mxu0 0.0
        %643 = vmatpush1.msra.mxu0 0.0
        %644 = vmatprep.subr.mxu0 %v387
        %645 = vmatpush1.msra.mxu0 %v385
        %646 = vmatprep.subr.mxu0 0.0
        %647 = vmatpush2.msra.mxu0 0.0
        %648 = vmatprep.subr.mxu0 0.0
        %649 = vmatpush2.msra.mxu0 0.0
        %650 = vmatprep.subr.mxu0 0.0
        %651 = vmatpush2.msra.mxu0 0.0
        %652 = vmatprep.subr.mxu0 0.0
        %653 = vmatpush2.msra.mxu0 0.0
        %654 = vmatprep.subr.mxu0 0.0
        %655 = vmatpush2.msra.mxu0 0.0
        %656 = vmatprep.subr.mxu0 0.0
        %657 = vmatpush2.msra.mxu0 0.0
        %658 = vmatprep.subr.mxu0 0.0
        %659 = vmatpush2.msra.mxu0 0.0
        %660 = vmatprep.subr.mxu0 0.0
        %661 = vmatpush2.msra.mxu0 0.0
        %662 = vmatprep.subr.mxu0 0.0
        %663 = vmatpush2.msra.mxu0 0.0
        %664 = vmatprep.subr.mxu0 0.0
        %665 = vmatpush2.msra.mxu0 0.0
        %666 = vmatprep.subr.mxu0 0.0
        %667 = vmatpush2.msra.mxu0 0.0
        %668 = vmatprep.subr.mxu0 0.0
        %669 = vmatpush2.msra.mxu0 0.0
        %670 = vmatprep.subr.mxu0 0.0
        %671 = vmatpush2.msra.mxu0 0.0
        %672 = vmatprep.subr.mxu0 0.0
        %673 = vmatpush2.msra.mxu0 0.0
        %674 = vmatprep.subr.mxu0 0.0
        %675 = vmatpush2.msra.mxu0 0.0
        %676 = vmatprep.subr.mxu0 0.0
        %677 = vmatpush2.msra.mxu0 0.0
        %678 = vmatprep.mubr.f32.mxu0 0.0
        %679 = vmatmul.mubr.f32.gmra.mxu0 %v370
        %v680 = vpop.f32.mrf.mxu0
        %v681 = vadd.f32 0.0, %v680
        %v682 = vpop.f32.mrf.mxu0
        %v683 = vadd.f32 0.0, %v682
        %684 = vdwg.mxu0
        %685 = vmatprep.subr.mxu0 0.0
        %686 = vmatpush1.msra.mxu0 0.0
        %687 = vmatprep.subr.mxu0 0.0
        %688 = vmatpush1.msra.mxu0 0.0
        %689 = vmatprep.subr.mxu0 0.0
        %690 = vmatpush1.msra.mxu0 0.0
        %691 = vmatprep.subr.mxu0 0.0
        %692 = vmatpush1.msra.mxu0 0.0
        %693 = vmatprep.subr.mxu0 0.0
        %694 = vmatpush1.msra.mxu0 0.0
        %695 = vmatprep.subr.mxu0 0.0
        %696 = vmatpush1.msra.mxu0 0.0
        %697 = vmatprep.subr.mxu0 0.0
        %698 = vmatpush1.msra.mxu0 0.0
        %699 = vmatprep.subr.mxu0 0.0
        %700 = vmatpush1.msra.mxu0 0.0
        %701 = vmatprep.subr.mxu0 0.0
        %702 = vmatpush1.msra.mxu0 0.0
        %703 = vmatprep.subr.mxu0 0.0
        %704 = vmatpush1.msra.mxu0 0.0
        %705 = vmatprep.subr.mxu0 0.0
        %706 = vmatpush1.msra.mxu0 0.0
        %707 = vmatprep.subr.mxu0 0.0
        %708 = vmatpush1.msra.mxu0 0.0
        %709 = vmatprep.subr.mxu0 0.0
        %710 = vmatpush1.msra.mxu0 0.0
        %711 = vmatprep.subr.mxu0 0.0
        %712 = vmatpush1.msra.mxu0 0.0
        %713 = vmatprep.subr.mxu0 0.0
        %714 = vmatpush1.msra.mxu0 0.0
        %715 = vmatprep.subr.mxu0 %v391
        %716 = vmatpush1.msra.mxu0 %v389
        %717 = vmatprep.subr.mxu0 0.0
        %718 = vmatpush2.msra.mxu0 0.0
        %719 = vmatprep.subr.mxu0 0.0
        %720 = vmatpush2.msra.mxu0 0.0
        %721 = vmatprep.subr.mxu0 0.0
        %722 = vmatpush2.msra.mxu0 0.0
        %723 = vmatprep.subr.mxu0 0.0
        %724 = vmatpush2.msra.mxu0 0.0
        %725 = vmatprep.subr.mxu0 0.0
        %726 = vmatpush2.msra.mxu0 0.0
        %727 = vmatprep.subr.mxu0 0.0
        %728 = vmatpush2.msra.mxu0 0.0
        %729 = vmatprep.subr.mxu0 0.0
        %730 = vmatpush2.msra.mxu0 0.0
        %731 = vmatprep.subr.mxu0 0.0
        %732 = vmatpush2.msra.mxu0 0.0
        %733 = vmatprep.subr.mxu0 0.0
        %734 = vmatpush2.msra.mxu0 0.0
        %735 = vmatprep.subr.mxu0 0.0
        %736 = vmatpush2.msra.mxu0 0.0
        %737 = vmatprep.subr.mxu0 0.0
        %738 = vmatpush2.msra.mxu0 0.0
        %739 = vmatprep.subr.mxu0 0.0
        %740 = vmatpush2.msra.mxu0 0.0
        %741 = vmatprep.subr.mxu0 0.0
        %742 = vmatpush2.msra.mxu0 0.0
        %743 = vmatprep.subr.mxu0 0.0
        %744 = vmatpush2.msra.mxu0 0.0
        %745 = vmatprep.subr.mxu0 0.0
        %746 = vmatpush2.msra.mxu0 0.0
        %747 = vmatprep.subr.mxu0 0.0
        %748 = vmatpush2.msra.mxu0 0.0
        %749 = vmatprep.mubr.f32.mxu0 0.0
        %750 = vmatmul.mubr.f32.gmra.mxu0 %v370
        %v751 = vpop.f32.mrf.mxu0
        %v752 = vadd.f32 0.0, %v751
        %v753 = vpop.f32.mrf.mxu0
        %v754 = vadd.f32 0.0, %v753
        %755 = vdwg.mxu0
        %756 = vmatprep.subr.mxu0 0.0
        %757 = vmatpush1.msra.mxu0 0.0
        %758 = vmatprep.subr.mxu0 0.0
        %759 = vmatpush1.msra.mxu0 0.0
        %760 = vmatprep.subr.mxu0 0.0
        %761 = vmatpush1.msra.mxu0 0.0
        %762 = vmatprep.subr.mxu0 0.0
        %763 = vmatpush1.msra.mxu0 0.0
        %764 = vmatprep.subr.mxu0 0.0
        %765 = vmatpush1.msra.mxu0 0.0
        %766 = vmatprep.subr.mxu0 0.0
        %767 = vmatpush1.msra.mxu0 0.0
        %768 = vmatprep.subr.mxu0 0.0
        %769 = vmatpush1.msra.mxu0 0.0
        %770 = vmatprep.subr.mxu0 0.0
        %771 = vmatpush1.msra.mxu0 0.0
        %772 = vmatprep.subr.mxu0 0.0
        %773 = vmatpush1.msra.mxu0 0.0
        %774 = vmatprep.subr.mxu0 0.0
        %775 = vmatpush1.msra.mxu0 0.0
        %776 = vmatprep.subr.mxu0 0.0
        %777 = vmatpush1.msra.mxu0 0.0
        %778 = vmatprep.subr.mxu0 0.0
        %779 = vmatpush1.msra.mxu0 0.0
        %780 = vmatprep.subr.mxu0 0.0
        %781 = vmatpush1.msra.mxu0 0.0
        %782 = vmatprep.subr.mxu0 0.0
        %783 = vmatpush1.msra.mxu0 0.0
        %784 = vmatprep.subr.mxu0 0.0
        %785 = vmatpush1.msra.mxu0 0.0
        %786 = vmatprep.subr.mxu0 %v395
        %787 = vmatpush1.msra.mxu0 %v393
        %788 = vmatprep.subr.mxu0 0.0
        %789 = vmatpush2.msra.mxu0 0.0
        %790 = vmatprep.subr.mxu0 0.0
        %791 = vmatpush2.msra.mxu0 0.0
        %792 = vmatprep.subr.mxu0 0.0
        %793 = vmatpush2.msra.mxu0 0.0
        %794 = vmatprep.subr.mxu0 0.0
        %795 = vmatpush2.msra.mxu0 0.0
        %796 = vmatprep.subr.mxu0 0.0
        %797 = vmatpush2.msra.mxu0 0.0
        %798 = vmatprep.subr.mxu0 0.0
        %799 = vmatpush2.msra.mxu0 0.0
        %800 = vmatprep.subr.mxu0 0.0
        %801 = vmatpush2.msra.mxu0 0.0
        %802 = vmatprep.subr.mxu0 0.0
        %803 = vmatpush2.msra.mxu0 0.0
        %804 = vmatprep.subr.mxu0 0.0
        %805 = vmatpush2.msra.mxu0 0.0
        %806 = vmatprep.subr.mxu0 0.0
        %807 = vmatpush2.msra.mxu0 0.0
        %808 = vmatprep.subr.mxu0 0.0
        %809 = vmatpush2.msra.mxu0 0.0
        %810 = vmatprep.subr.mxu0 0.0
        %811 = vmatpush2.msra.mxu0 0.0
        %812 = vmatprep.subr.mxu0 0.0
        %813 = vmatpush2.msra.mxu0 0.0
        %814 = vmatprep.subr.mxu0 0.0
        %815 = vmatpush2.msra.mxu0 0.0
        %816 = vmatprep.subr.mxu0 0.0
        %817 = vmatpush2.msra.mxu0 0.0
        %818 = vmatprep.subr.mxu0 0.0
        %819 = vmatpush2.msra.mxu0 0.0
        %820 = vmatprep.mubr.f32.mxu0 0.0
        %821 = vmatmul.mubr.f32.gmra.mxu0 %v370
        %v822 = vpop.f32.mrf.mxu0
        %v823 = vadd.f32 0.0, %v822
        %v824 = vpop.f32.mrf.mxu0
        %v825 = vadd.f32 0.0, %v824
        %826 = vdwg.mxu0
        %827 = vmatprep.subr.mxu0 0.0
        %828 = vmatpush1.msra.mxu0 0.0
        %829 = vmatprep.subr.mxu0 0.0
        %830 = vmatpush1.msra.mxu0 0.0
        %831 = vmatprep.subr.mxu0 0.0
        %832 = vmatpush1.msra.mxu0 0.0
        %833 = vmatprep.subr.mxu0 0.0
        %834 = vmatpush1.msra.mxu0 0.0
        %835 = vmatprep.subr.mxu0 0.0
        %836 = vmatpush1.msra.mxu0 0.0
        %837 = vmatprep.subr.mxu0 0.0
        %838 = vmatpush1.msra.mxu0 0.0
        %839 = vmatprep.subr.mxu0 0.0
        %840 = vmatpush1.msra.mxu0 0.0
        %841 = vmatprep.subr.mxu0 0.0
        %842 = vmatpush1.msra.mxu0 0.0
        %843 = vmatprep.subr.mxu0 0.0
        %844 = vmatpush1.msra.mxu0 0.0
        %845 = vmatprep.subr.mxu0 0.0
        %846 = vmatpush1.msra.mxu0 0.0
        %847 = vmatprep.subr.mxu0 0.0
        %848 = vmatpush1.msra.mxu0 0.0
        %849 = vmatprep.subr.mxu0 0.0
        %850 = vmatpush1.msra.mxu0 0.0
        %851 = vmatprep.subr.mxu0 0.0
        %852 = vmatpush1.msra.mxu0 0.0
        %853 = vmatprep.subr.mxu0 0.0
        %854 = vmatpush1.msra.mxu0 0.0
        %855 = vmatprep.subr.mxu0 0.0
        %856 = vmatpush1.msra.mxu0 0.0
        %857 = vmatprep.subr.mxu0 %v399
        %858 = vmatpush1.msra.mxu0 %v397
        %859 = vmatprep.subr.mxu0 0.0
        %860 = vmatpush2.msra.mxu0 0.0
        %861 = vmatprep.subr.mxu0 0.0
        %862 = vmatpush2.msra.mxu0 0.0
        %863 = vmatprep.subr.mxu0 0.0
        %864 = vmatpush2.msra.mxu0 0.0
        %865 = vmatprep.subr.mxu0 0.0
        %866 = vmatpush2.msra.mxu0 0.0
        %867 = vmatprep.subr.mxu0 0.0
        %868 = vmatpush2.msra.mxu0 0.0
        %869 = vmatprep.subr.mxu0 0.0
        %870 = vmatpush2.msra.mxu0 0.0
        %871 = vmatprep.subr.mxu0 0.0
        %872 = vmatpush2.msra.mxu0 0.0
        %873 = vmatprep.subr.mxu0 0.0
        %874 = vmatpush2.msra.mxu0 0.0
        %875 = vmatprep.subr.mxu0 0.0
        %876 = vmatpush2.msra.mxu0 0.0
        %877 = vmatprep.subr.mxu0 0.0
        %878 = vmatpush2.msra.mxu0 0.0
        %879 = vmatprep.subr.mxu0 0.0
        %880 = vmatpush2.msra.mxu0 0.0
        %881 = vmatprep.subr.mxu0 0.0
        %882 = vmatpush2.msra.mxu0 0.0
        %883 = vmatprep.subr.mxu0 0.0
        %884 = vmatpush2.msra.mxu0 0.0
        %885 = vmatprep.subr.mxu0 0.0
        %886 = vmatpush2.msra.mxu0 0.0
        %887 = vmatprep.subr.mxu0 0.0
        %888 = vmatpush2.msra.mxu0 0.0
        %889 = vmatprep.subr.mxu0 0.0
        %890 = vmatpush2.msra.mxu0 0.0
        %891 = vmatprep.mubr.f32.mxu0 0.0
        %892 = vmatmul.mubr.f32.gmra.mxu0 %v370
        %v893 = vpop.f32.mrf.mxu0
        %v894 = vadd.f32 0.0, %v893
        %v895 = vpop.f32.mrf.mxu0
        %v896 = vadd.f32 0.0, %v895
        %897 = vdwg.mxu0
        %v905 = vcombine.high %v347, %v347
        %v906 = vcombine.high %v348, %v348
        %v907 = vcombine.high %v349, %v349
        %v908 = vcombine.high %v350, %v350
        %v909 = vcombine.high %v351, %v351
        %v910 = vcombine.high %v352, %v352
        %v911 = vcombine.high %v353, %v353
        %v913 = vsel %vm368, %v339, 0
        %v915 = vsel %vm372, %v347, 0
        %v917 = vsel %vm372, %v905, 0
        %v919 = vsel %vm372, %v348, 0
        %v921 = vsel %vm372, %v906, 0
        %v923 = vsel %vm372, %v349, 0
        %v925 = vsel %vm372, %v907, 0
        %v927 = vsel %vm372, %v350, 0
        %v929 = vsel %vm372, %v908, 0
        %v931 = vsel %vm372, %v351, 0
        %v933 = vsel %vm372, %v909, 0
        %v935 = vsel %vm372, %v352, 0
        %v937 = vsel %vm372, %v910, 0
        %v939 = vsel %vm372, %v353, 0
        %v941 = vsel %vm372, %v911, 0
        %943 = vmatprep.subr.mxu0 0.0
        %944 = vmatpush1.msra.mxu0 0.0
        %945 = vmatprep.subr.mxu0 0.0
        %946 = vmatpush1.msra.mxu0 0.0
        %947 = vmatprep.subr.mxu0 0.0
        %948 = vmatpush1.msra.mxu0 0.0
        %949 = vmatprep.subr.mxu0 0.0
        %950 = vmatpush1.msra.mxu0 0.0
        %951 = vmatprep.subr.mxu0 0.0
        %952 = vmatpush1.msra.mxu0 0.0
        %953 = vmatprep.subr.mxu0 0.0
        %954 = vmatpush1.msra.mxu0 0.0
        %955 = vmatprep.subr.mxu0 0.0
        %956 = vmatpush1.msra.mxu0 0.0
        %957 = vmatprep.subr.mxu0 0.0
        %958 = vmatpush1.msra.mxu0 0.0
        %959 = vmatprep.subr.mxu0 0.0
        %960 = vmatpush1.msra.mxu0 0.0
        %961 = vmatprep.subr.mxu0 0.0
        %962 = vmatpush1.msra.mxu0 0.0
        %963 = vmatprep.subr.mxu0 0.0
        %964 = vmatpush1.msra.mxu0 0.0
        %965 = vmatprep.subr.mxu0 0.0
        %966 = vmatpush1.msra.mxu0 0.0
        %967 = vmatprep.subr.mxu0 0.0
        %968 = vmatpush1.msra.mxu0 0.0
        %969 = vmatprep.subr.mxu0 0.0
        %970 = vmatpush1.msra.mxu0 0.0
        %971 = vmatprep.subr.mxu0 0.0
        %972 = vmatpush1.msra.mxu0 0.0
        %973 = vmatprep.subr.mxu0 %v917
        %974 = vmatpush1.msra.mxu0 %v915
        %975 = vmatprep.subr.mxu0 0.0
        %976 = vmatpush2.msra.mxu0 0.0
        %977 = vmatprep.subr.mxu0 0.0
        %978 = vmatpush2.msra.mxu0 0.0
        %979 = vmatprep.subr.mxu0 0.0
        %980 = vmatpush2.msra.mxu0 0.0
        %981 = vmatprep.subr.mxu0 0.0
        %982 = vmatpush2.msra.mxu0 0.0
        %983 = vmatprep.subr.mxu0 0.0
        %984 = vmatpush2.msra.mxu0 0.0
        %985 = vmatprep.subr.mxu0 0.0
        %986 = vmatpush2.msra.mxu0 0.0
        %987 = vmatprep.subr.mxu0 0.0
        %988 = vmatpush2.msra.mxu0 0.0
        %989 = vmatprep.subr.mxu0 0.0
        %990 = vmatpush2.msra.mxu0 0.0
        %991 = vmatprep.subr.mxu0 0.0
        %992 = vmatpush2.msra.mxu0 0.0
        %993 = vmatprep.subr.mxu0 0.0
        %994 = vmatpush2.msra.mxu0 0.0
        %995 = vmatprep.subr.mxu0 0.0
        %996 = vmatpush2.msra.mxu0 0.0
        %997 = vmatprep.subr.mxu0 0.0
        %998 = vmatpush2.msra.mxu0 0.0
        %999 = vmatprep.subr.mxu0 0.0
        %1000 = vmatpush2.msra.mxu0 0.0
        %1001 = vmatprep.subr.mxu0 0.0
        %1002 = vmatpush2.msra.mxu0 0.0
        %1003 = vmatprep.subr.mxu0 0.0
        %1004 = vmatpush2.msra.mxu0 0.0
        %1005 = vmatprep.subr.mxu0 0.0
        %1006 = vmatpush2.msra.mxu0 0.0
        %1007 = vmatprep.mubr.f32.mxu0 0.0
        %1008 = vmatmul.mubr.f32.gmra.mxu0 %v913
        %v1009 = vpop.f32.mrf.mxu0
        %v1010 = vadd.f32 0.0, %v1009
        %v1011 = vpop.f32.mrf.mxu0
        %v1012 = vadd.f32 0.0, %v1011
        %1013 = vdwg.mxu0
        %1014 = vmatprep.subr.mxu0 0.0
        %1015 = vmatpush1.msra.mxu0 0.0
        %1016 = vmatprep.subr.mxu0 0.0
        %1017 = vmatpush1.msra.mxu0 0.0
        %1018 = vmatprep.subr.mxu0 0.0
        %1019 = vmatpush1.msra.mxu0 0.0
        %1020 = vmatprep.subr.mxu0 0.0
        %1021 = vmatpush1.msra.mxu0 0.0
        %1022 = vmatprep.subr.mxu0 0.0
        %1023 = vmatpush1.msra.mxu0 0.0
        %1024 = vmatprep.subr.mxu0 0.0
        %1025 = vmatpush1.msra.mxu0 0.0
        %1026 = vmatprep.subr.mxu0 0.0
        %1027 = vmatpush1.msra.mxu0 0.0
        %1028 = vmatprep.subr.mxu0 0.0
        %1029 = vmatpush1.msra.mxu0 0.0
        %1030 = vmatprep.subr.mxu0 0.0
        %1031 = vmatpush1.msra.mxu0 0.0
        %1032 = vmatprep.subr.mxu0 0.0
        %1033 = vmatpush1.msra.mxu0 0.0
        %1034 = vmatprep.subr.mxu0 0.0
        %1035 = vmatpush1.msra.mxu0 0.0
        %1036 = vmatprep.subr.mxu0 0.0
        %1037 = vmatpush1.msra.mxu0 0.0
        %1038 = vmatprep.subr.mxu0 0.0
        %1039 = vmatpush1.msra.mxu0 0.0
        %1040 = vmatprep.subr.mxu0 0.0
        %1041 = vmatpush1.msra.mxu0 0.0
        %1042 = vmatprep.subr.mxu0 0.0
        %1043 = vmatpush1.msra.mxu0 0.0
        %1044 = vmatprep.subr.mxu0 %v921
        %1045 = vmatpush1.msra.mxu0 %v919
        %1046 = vmatprep.subr.mxu0 0.0
        %1047 = vmatpush2.msra.mxu0 0.0
        %1048 = vmatprep.subr.mxu0 0.0
        %1049 = vmatpush2.msra.mxu0 0.0
        %1050 = vmatprep.subr.mxu0 0.0
        %1051 = vmatpush2.msra.mxu0 0.0
        %1052 = vmatprep.subr.mxu0 0.0
        %1053 = vmatpush2.msra.mxu0 0.0
        %1054 = vmatprep.subr.mxu0 0.0
        %1055 = vmatpush2.msra.mxu0 0.0
        %1056 = vmatprep.subr.mxu0 0.0
        %1057 = vmatpush2.msra.mxu0 0.0
        %1058 = vmatprep.subr.mxu0 0.0
        %1059 = vmatpush2.msra.mxu0 0.0
        %1060 = vmatprep.subr.mxu0 0.0
        %1061 = vmatpush2.msra.mxu0 0.0
        %1062 = vmatprep.subr.mxu0 0.0
        %1063 = vmatpush2.msra.mxu0 0.0
        %1064 = vmatprep.subr.mxu0 0.0
        %1065 = vmatpush2.msra.mxu0 0.0
        %1066 = vmatprep.subr.mxu0 0.0
        %1067 = vmatpush2.msra.mxu0 0.0
        %1068 = vmatprep.subr.mxu0 0.0
        %1069 = vmatpush2.msra.mxu0 0.0
        %1070 = vmatprep.subr.mxu0 0.0
        %1071 = vmatpush2.msra.mxu0 0.0
        %1072 = vmatprep.subr.mxu0 0.0
        %1073 = vmatpush2.msra.mxu0 0.0
        %1074 = vmatprep.subr.mxu0 0.0
        %1075 = vmatpush2.msra.mxu0 0.0
        %1076 = vmatprep.subr.mxu0 0.0
        %1077 = vmatpush2.msra.mxu0 0.0
        %1078 = vmatprep.mubr.f32.mxu0 0.0
        %1079 = vmatmul.mubr.f32.gmra.mxu0 %v913
        %v1080 = vpop.f32.mrf.mxu0
        %v1081 = vadd.f32 0.0, %v1080
        %v1082 = vpop.f32.mrf.mxu0
        %v1083 = vadd.f32 0.0, %v1082
        %1084 = vdwg.mxu0
        %1085 = vmatprep.subr.mxu0 0.0
        %1086 = vmatpush1.msra.mxu0 0.0
        %1087 = vmatprep.subr.mxu0 0.0
        %1088 = vmatpush1.msra.mxu0 0.0
        %1089 = vmatprep.subr.mxu0 0.0
        %1090 = vmatpush1.msra.mxu0 0.0
        %1091 = vmatprep.subr.mxu0 0.0
        %1092 = vmatpush1.msra.mxu0 0.0
        %1093 = vmatprep.subr.mxu0 0.0
        %1094 = vmatpush1.msra.mxu0 0.0
        %1095 = vmatprep.subr.mxu0 0.0
        %1096 = vmatpush1.msra.mxu0 0.0
        %1097 = vmatprep.subr.mxu0 0.0
        %1098 = vmatpush1.msra.mxu0 0.0
        %1099 = vmatprep.subr.mxu0 0.0
        %1100 = vmatpush1.msra.mxu0 0.0
        %1101 = vmatprep.subr.mxu0 0.0
        %1102 = vmatpush1.msra.mxu0 0.0
        %1103 = vmatprep.subr.mxu0 0.0
        %1104 = vmatpush1.msra.mxu0 0.0
        %1105 = vmatprep.subr.mxu0 0.0
        %1106 = vmatpush1.msra.mxu0 0.0
        %1107 = vmatprep.subr.mxu0 0.0
        %1108 = vmatpush1.msra.mxu0 0.0
        %1109 = vmatprep.subr.mxu0 0.0
        %1110 = vmatpush1.msra.mxu0 0.0
        %1111 = vmatprep.subr.mxu0 0.0
        %1112 = vmatpush1.msra.mxu0 0.0
        %1113 = vmatprep.subr.mxu0 0.0
        %1114 = vmatpush1.msra.mxu0 0.0
        %1115 = vmatprep.subr.mxu0 %v925
        %1116 = vmatpush1.msra.mxu0 %v923
        %1117 = vmatprep.subr.mxu0 0.0
        %1118 = vmatpush2.msra.mxu0 0.0
        %1119 = vmatprep.subr.mxu0 0.0
        %1120 = vmatpush2.msra.mxu0 0.0
        %1121 = vmatprep.subr.mxu0 0.0
        %1122 = vmatpush2.msra.mxu0 0.0
        %1123 = vmatprep.subr.mxu0 0.0
        %1124 = vmatpush2.msra.mxu0 0.0
        %1125 = vmatprep.subr.mxu0 0.0
        %1126 = vmatpush2.msra.mxu0 0.0
        %1127 = vmatprep.subr.mxu0 0.0
        %1128 = vmatpush2.msra.mxu0 0.0
        %1129 = vmatprep.subr.mxu0 0.0
        %1130 = vmatpush2.msra.mxu0 0.0
        %1131 = vmatprep.subr.mxu0 0.0
        %1132 = vmatpush2.msra.mxu0 0.0
        %1133 = vmatprep.subr.mxu0 0.0
        %1134 = vmatpush2.msra.mxu0 0.0
        %1135 = vmatprep.subr.mxu0 0.0
        %1136 = vmatpush2.msra.mxu0 0.0
        %1137 = vmatprep.subr.mxu0 0.0
        %1138 = vmatpush2.msra.mxu0 0.0
        %1139 = vmatprep.subr.mxu0 0.0
        %1140 = vmatpush2.msra.mxu0 0.0
        %1141 = vmatprep.subr.mxu0 0.0
        %1142 = vmatpush2.msra.mxu0 0.0
        %1143 = vmatprep.subr.mxu0 0.0
        %1144 = vmatpush2.msra.mxu0 0.0
        %1145 = vmatprep.subr.mxu0 0.0
        %1146 = vmatpush2.msra.mxu0 0.0
        %1147 = vmatprep.subr.mxu0 0.0
        %1148 = vmatpush2.msra.mxu0 0.0
        %1149 = vmatprep.mubr.f32.mxu0 0.0
        %1150 = vmatmul.mubr.f32.gmra.mxu0 %v913
        %v1151 = vpop.f32.mrf.mxu0
        %v1152 = vadd.f32 0.0, %v1151
        %v1153 = vpop.f32.mrf.mxu0
        %v1154 = vadd.f32 0.0, %v1153
        %1155 = vdwg.mxu0
        %1156 = vmatprep.subr.mxu0 0.0
        %1157 = vmatpush1.msra.mxu0 0.0
        %1158 = vmatprep.subr.mxu0 0.0
        %1159 = vmatpush1.msra.mxu0 0.0
        %1160 = vmatprep.subr.mxu0 0.0
        %1161 = vmatpush1.msra.mxu0 0.0
        %1162 = vmatprep.subr.mxu0 0.0
        %1163 = vmatpush1.msra.mxu0 0.0
        %1164 = vmatprep.subr.mxu0 0.0
        %1165 = vmatpush1.msra.mxu0 0.0
        %1166 = vmatprep.subr.mxu0 0.0
        %1167 = vmatpush1.msra.mxu0 0.0
        %1168 = vmatprep.subr.mxu0 0.0
        %1169 = vmatpush1.msra.mxu0 0.0
        %1170 = vmatprep.subr.mxu0 0.0
        %1171 = vmatpush1.msra.mxu0 0.0
        %1172 = vmatprep.subr.mxu0 0.0
        %1173 = vmatpush1.msra.mxu0 0.0
        %1174 = vmatprep.subr.mxu0 0.0
        %1175 = vmatpush1.msra.mxu0 0.0
        %1176 = vmatprep.subr.mxu0 0.0
        %1177 = vmatpush1.msra.mxu0 0.0
        %1178 = vmatprep.subr.mxu0 0.0
        %1179 = vmatpush1.msra.mxu0 0.0
        %1180 = vmatprep.subr.mxu0 0.0
        %1181 = vmatpush1.msra.mxu0 0.0
        %1182 = vmatprep.subr.mxu0 0.0
        %1183 = vmatpush1.msra.mxu0 0.0
        %1184 = vmatprep.subr.mxu0 0.0
        %1185 = vmatpush1.msra.mxu0 0.0
        %1186 = vmatprep.subr.mxu0 %v929
        %1187 = vmatpush1.msra.mxu0 %v927
        %1188 = vmatprep.subr.mxu0 0.0
        %1189 = vmatpush2.msra.mxu0 0.0
        %1190 = vmatprep.subr.mxu0 0.0
        %1191 = vmatpush2.msra.mxu0 0.0
        %1192 = vmatprep.subr.mxu0 0.0
        %1193 = vmatpush2.msra.mxu0 0.0
        %1194 = vmatprep.subr.mxu0 0.0
        %1195 = vmatpush2.msra.mxu0 0.0
        %1196 = vmatprep.subr.mxu0 0.0
        %1197 = vmatpush2.msra.mxu0 0.0
        %1198 = vmatprep.subr.mxu0 0.0
        %1199 = vmatpush2.msra.mxu0 0.0
        %1200 = vmatprep.subr.mxu0 0.0
        %1201 = vmatpush2.msra.mxu0 0.0
        %1202 = vmatprep.subr.mxu0 0.0
        %1203 = vmatpush2.msra.mxu0 0.0
        %1204 = vmatprep.subr.mxu0 0.0
        %1205 = vmatpush2.msra.mxu0 0.0
        %1206 = vmatprep.subr.mxu0 0.0
        %1207 = vmatpush2.msra.mxu0 0.0
        %1208 = vmatprep.subr.mxu0 0.0
        %1209 = vmatpush2.msra.mxu0 0.0
        %1210 = vmatprep.subr.mxu0 0.0
        %1211 = vmatpush2.msra.mxu0 0.0
        %1212 = vmatprep.subr.mxu0 0.0
        %1213 = vmatpush2.msra.mxu0 0.0
        %1214 = vmatprep.subr.mxu0 0.0
        %1215 = vmatpush2.msra.mxu0 0.0
        %1216 = vmatprep.subr.mxu0 0.0
        %1217 = vmatpush2.msra.mxu0 0.0
        %1218 = vmatprep.subr.mxu0 0.0
        %1219 = vmatpush2.msra.mxu0 0.0
        %1220 = vmatprep.mubr.f32.mxu0 0.0
        %1221 = vmatmul.mubr.f32.gmra.mxu0 %v913
        %v1222 = vpop.f32.mrf.mxu0
        %v1223 = vadd.f32 0.0, %v1222
        %v1224 = vpop.f32.mrf.mxu0
        %v1225 = vadd.f32 0.0, %v1224
        %1226 = vdwg.mxu0
        %1227 = vmatprep.subr.mxu0 0.0
        %1228 = vmatpush1.msra.mxu0 0.0
        %1229 = vmatprep.subr.mxu0 0.0
        %1230 = vmatpush1.msra.mxu0 0.0
        %1231 = vmatprep.subr.mxu0 0.0
        %1232 = vmatpush1.msra.mxu0 0.0
        %1233 = vmatprep.subr.mxu0 0.0
        %1234 = vmatpush1.msra.mxu0 0.0
        %1235 = vmatprep.subr.mxu0 0.0
        %1236 = vmatpush1.msra.mxu0 0.0
        %1237 = vmatprep.subr.mxu0 0.0
        %1238 = vmatpush1.msra.mxu0 0.0
        %1239 = vmatprep.subr.mxu0 0.0
        %1240 = vmatpush1.msra.mxu0 0.0
        %1241 = vmatprep.subr.mxu0 0.0
        %1242 = vmatpush1.msra.mxu0 0.0
        %1243 = vmatprep.subr.mxu0 0.0
        %1244 = vmatpush1.msra.mxu0 0.0
        %1245 = vmatprep.subr.mxu0 0.0
        %1246 = vmatpush1.msra.mxu0 0.0
        %1247 = vmatprep.subr.mxu0 0.0
        %1248 = vmatpush1.msra.mxu0 0.0
        %1249 = vmatprep.subr.mxu0 0.0
        %1250 = vmatpush1.msra.mxu0 0.0
        %1251 = vmatprep.subr.mxu0 0.0
        %1252 = vmatpush1.msra.mxu0 0.0
        %1253 = vmatprep.subr.mxu0 0.0
        %1254 = vmatpush1.msra.mxu0 0.0
        %1255 = vmatprep.subr.mxu0 0.0
        %1256 = vmatpush1.msra.mxu0 0.0
        %1257 = vmatprep.subr.mxu0 %v933
        %1258 = vmatpush1.msra.mxu0 %v931
        %1259 = vmatprep.subr.mxu0 0.0
        %1260 = vmatpush2.msra.mxu0 0.0
        %1261 = vmatprep.subr.mxu0 0.0
        %1262 = vmatpush2.msra.mxu0 0.0
        %1263 = vmatprep.subr.mxu0 0.0
        %1264 = vmatpush2.msra.mxu0 0.0
        %1265 = vmatprep.subr.mxu0 0.0
        %1266 = vmatpush2.msra.mxu0 0.0
        %1267 = vmatprep.subr.mxu0 0.0
        %1268 = vmatpush2.msra.mxu0 0.0
        %1269 = vmatprep.subr.mxu0 0.0
        %1270 = vmatpush2.msra.mxu0 0.0
        %1271 = vmatprep.subr.mxu0 0.0
        %1272 = vmatpush2.msra.mxu0 0.0
        %1273 = vmatprep.subr.mxu0 0.0
        %1274 = vmatpush2.msra.mxu0 0.0
        %1275 = vmatprep.subr.mxu0 0.0
        %1276 = vmatpush2.msra.mxu0 0.0
        %1277 = vmatprep.subr.mxu0 0.0
        %1278 = vmatpush2.msra.mxu0 0.0
        %1279 = vmatprep.subr.mxu0 0.0
        %1280 = vmatpush2.msra.mxu0 0.0
        %1281 = vmatprep.subr.mxu0 0.0
        %1282 = vmatpush2.msra.mxu0 0.0
        %1283 = vmatprep.subr.mxu0 0.0
        %1284 = vmatpush2.msra.mxu0 0.0
        %1285 = vmatprep.subr.mxu0 0.0
        %1286 = vmatpush2.msra.mxu0 0.0
        %1287 = vmatprep.subr.mxu0 0.0
        %1288 = vmatpush2.msra.mxu0 0.0
        %1289 = vmatprep.subr.mxu0 0.0
        %1290 = vmatpush2.msra.mxu0 0.0
        %1291 = vmatprep.mubr.f32.mxu0 0.0
        %1292 = vmatmul.mubr.f32.gmra.mxu0 %v913
        %v1293 = vpop.f32.mrf.mxu0
        %v1294 = vadd.f32 0.0, %v1293
        %v1295 = vpop.f32.mrf.mxu0
        %v1296 = vadd.f32 0.0, %v1295
        %1297 = vdwg.mxu0
        %1298 = vmatprep.subr.mxu0 0.0
        %1299 = vmatpush1.msra.mxu0 0.0
        %1300 = vmatprep.subr.mxu0 0.0
        %1301 = vmatpush1.msra.mxu0 0.0
        %1302 = vmatprep.subr.mxu0 0.0
        %1303 = vmatpush1.msra.mxu0 0.0
        %1304 = vmatprep.subr.mxu0 0.0
        %1305 = vmatpush1.msra.mxu0 0.0
        %1306 = vmatprep.subr.mxu0 0.0
        %1307 = vmatpush1.msra.mxu0 0.0
        %1308 = vmatprep.subr.mxu0 0.0
        %1309 = vmatpush1.msra.mxu0 0.0
        %1310 = vmatprep.subr.mxu0 0.0
        %1311 = vmatpush1.msra.mxu0 0.0
        %1312 = vmatprep.subr.mxu0 0.0
        %1313 = vmatpush1.msra.mxu0 0.0
        %1314 = vmatprep.subr.mxu0 0.0
        %1315 = vmatpush1.msra.mxu0 0.0
        %1316 = vmatprep.subr.mxu0 0.0
        %1317 = vmatpush1.msra.mxu0 0.0
        %1318 = vmatprep.subr.mxu0 0.0
        %1319 = vmatpush1.msra.mxu0 0.0
        %1320 = vmatprep.subr.mxu0 0.0
        %1321 = vmatpush1.msra.mxu0 0.0
        %1322 = vmatprep.subr.mxu0 0.0
        %1323 = vmatpush1.msra.mxu0 0.0
        %1324 = vmatprep.subr.mxu0 0.0
        %1325 = vmatpush1.msra.mxu0 0.0
        %1326 = vmatprep.subr.mxu0 0.0
        %1327 = vmatpush1.msra.mxu0 0.0
        %1328 = vmatprep.subr.mxu0 %v937
        %1329 = vmatpush1.msra.mxu0 %v935
        %1330 = vmatprep.subr.mxu0 0.0
        %1331 = vmatpush2.msra.mxu0 0.0
        %1332 = vmatprep.subr.mxu0 0.0
        %1333 = vmatpush2.msra.mxu0 0.0
        %1334 = vmatprep.subr.mxu0 0.0
        %1335 = vmatpush2.msra.mxu0 0.0
        %1336 = vmatprep.subr.mxu0 0.0
        %1337 = vmatpush2.msra.mxu0 0.0
        %1338 = vmatprep.subr.mxu0 0.0
        %1339 = vmatpush2.msra.mxu0 0.0
        %1340 = vmatprep.subr.mxu0 0.0
        %1341 = vmatpush2.msra.mxu0 0.0
        %1342 = vmatprep.subr.mxu0 0.0
        %1343 = vmatpush2.msra.mxu0 0.0
        %1344 = vmatprep.subr.mxu0 0.0
        %1345 = vmatpush2.msra.mxu0 0.0
        %1346 = vmatprep.subr.mxu0 0.0
        %1347 = vmatpush2.msra.mxu0 0.0
        %1348 = vmatprep.subr.mxu0 0.0
        %1349 = vmatpush2.msra.mxu0 0.0
        %1350 = vmatprep.subr.mxu0 0.0
        %1351 = vmatpush2.msra.mxu0 0.0
        %1352 = vmatprep.subr.mxu0 0.0
        %1353 = vmatpush2.msra.mxu0 0.0
        %1354 = vmatprep.subr.mxu0 0.0
        %1355 = vmatpush2.msra.mxu0 0.0
        %1356 = vmatprep.subr.mxu0 0.0
        %1357 = vmatpush2.msra.mxu0 0.0
        %1358 = vmatprep.subr.mxu0 0.0
        %1359 = vmatpush2.msra.mxu0 0.0
        %1360 = vmatprep.subr.mxu0 0.0
        %1361 = vmatpush2.msra.mxu0 0.0
        %1362 = vmatprep.mubr.f32.mxu0 0.0
        %1363 = vmatmul.mubr.f32.gmra.mxu0 %v913
        %v1364 = vpop.f32.mrf.mxu0
        %v1365 = vadd.f32 0.0, %v1364
        %v1366 = vpop.f32.mrf.mxu0
        %v1367 = vadd.f32 0.0, %v1366
        %1368 = vdwg.mxu0
        %1369 = vmatprep.subr.mxu0 0.0
        %1370 = vmatpush1.msra.mxu0 0.0
        %1371 = vmatprep.subr.mxu0 0.0
        %1372 = vmatpush1.msra.mxu0 0.0
        %1373 = vmatprep.subr.mxu0 0.0
        %1374 = vmatpush1.msra.mxu0 0.0
        %1375 = vmatprep.subr.mxu0 0.0
        %1376 = vmatpush1.msra.mxu0 0.0
        %1377 = vmatprep.subr.mxu0 0.0
        %1378 = vmatpush1.msra.mxu0 0.0
        %1379 = vmatprep.subr.mxu0 0.0
        %1380 = vmatpush1.msra.mxu0 0.0
        %1381 = vmatprep.subr.mxu0 0.0
        %1382 = vmatpush1.msra.mxu0 0.0
        %1383 = vmatprep.subr.mxu0 0.0
        %1384 = vmatpush1.msra.mxu0 0.0
        %1385 = vmatprep.subr.mxu0 0.0
        %1386 = vmatpush1.msra.mxu0 0.0
        %1387 = vmatprep.subr.mxu0 0.0
        %1388 = vmatpush1.msra.mxu0 0.0
        %1389 = vmatprep.subr.mxu0 0.0
        %1390 = vmatpush1.msra.mxu0 0.0
        %1391 = vmatprep.subr.mxu0 0.0
        %1392 = vmatpush1.msra.mxu0 0.0
        %1393 = vmatprep.subr.mxu0 0.0
        %1394 = vmatpush1.msra.mxu0 0.0
        %1395 = vmatprep.subr.mxu0 0.0
        %1396 = vmatpush1.msra.mxu0 0.0
        %1397 = vmatprep.subr.mxu0 0.0
        %1398 = vmatpush1.msra.mxu0 0.0
        %1399 = vmatprep.subr.mxu0 %v941
        %1400 = vmatpush1.msra.mxu0 %v939
        %1401 = vmatprep.subr.mxu0 0.0
        %1402 = vmatpush2.msra.mxu0 0.0
        %1403 = vmatprep.subr.mxu0 0.0
        %1404 = vmatpush2.msra.mxu0 0.0
        %1405 = vmatprep.subr.mxu0 0.0
        %1406 = vmatpush2.msra.mxu0 0.0
        %1407 = vmatprep.subr.mxu0 0.0
        %1408 = vmatpush2.msra.mxu0 0.0
        %1409 = vmatprep.subr.mxu0 0.0
        %1410 = vmatpush2.msra.mxu0 0.0
        %1411 = vmatprep.subr.mxu0 0.0
        %1412 = vmatpush2.msra.mxu0 0.0
        %1413 = vmatprep.subr.mxu0 0.0
        %1414 = vmatpush2.msra.mxu0 0.0
        %1415 = vmatprep.subr.mxu0 0.0
        %1416 = vmatpush2.msra.mxu0 0.0
        %1417 = vmatprep.subr.mxu0 0.0
        %1418 = vmatpush2.msra.mxu0 0.0
        %1419 = vmatprep.subr.mxu0 0.0
        %1420 = vmatpush2.msra.mxu0 0.0
        %1421 = vmatprep.subr.mxu0 0.0
        %1422 = vmatpush2.msra.mxu0 0.0
        %1423 = vmatprep.subr.mxu0 0.0
        %1424 = vmatpush2.msra.mxu0 0.0
        %1425 = vmatprep.subr.mxu0 0.0
        %1426 = vmatpush2.msra.mxu0 0.0
        %1427 = vmatprep.subr.mxu0 0.0
        %1428 = vmatpush2.msra.mxu0 0.0
        %1429 = vmatprep.subr.mxu0 0.0
        %1430 = vmatpush2.msra.mxu0 0.0
        %1431 = vmatprep.subr.mxu0 0.0
        %1432 = vmatpush2.msra.mxu0 0.0
        %1433 = vmatprep.mubr.f32.mxu0 0.0
        %1434 = vmatmul.mubr.f32.gmra.mxu0 %v913
        %v1435 = vpop.f32.mrf.mxu0
        %v1436 = vadd.f32 0.0, %v1435
        %v1437 = vpop.f32.mrf.mxu0
        %v1438 = vadd.f32 0.0, %v1437
        %1439 = vdwg.mxu0
        %1440 = vmatprep.subr.mxu0 0.0
        %1441 = vmatpush1.msra.mxu0 0.0
        %1442 = vmatprep.subr.mxu0 0.0
        %1443 = vmatpush1.msra.mxu0 0.0
        %1444 = vmatprep.subr.mxu0 0.0
        %1445 = vmatpush1.msra.mxu0 0.0
        %1446 = vmatprep.subr.mxu0 0.0
        %1447 = vmatpush1.msra.mxu0 0.0
        %1448 = vmatprep.subr.mxu0 0.0
        %1449 = vmatpush1.msra.mxu0 0.0
        %1450 = vmatprep.subr.mxu0 0.0
        %1451 = vmatpush1.msra.mxu0 0.0
        %1452 = vmatprep.subr.mxu0 0.0
        %1453 = vmatpush1.msra.mxu0 0.0
        %1454 = vmatprep.subr.mxu0 0.0
        %1455 = vmatpush1.msra.mxu0 0.0
        %1456 = vmatprep.subr.mxu0 0.0
        %1457 = vmatpush1.msra.mxu0 0.0
        %1458 = vmatprep.subr.mxu0 0.0
        %1459 = vmatpush1.msra.mxu0 0.0
        %1460 = vmatprep.subr.mxu0 0.0
        %1461 = vmatpush1.msra.mxu0 0.0
        %1462 = vmatprep.subr.mxu0 0.0
        %1463 = vmatpush1.msra.mxu0 0.0
        %1464 = vmatprep.subr.mxu0 0.0
        %1465 = vmatpush1.msra.mxu0 0.0
        %1466 = vmatprep.subr.mxu0 0.0
        %1467 = vmatpush1.msra.mxu0 0.0
        %1468 = vmatprep.subr.mxu0 0.0
        %1469 = vmatpush1.msra.mxu0 0.0
        %1470 = vmatprep.subr.mxu0 %v917
        %1471 = vmatpush1.msra.mxu0 %v915
        %1472 = vmatprep.subr.mxu0 0.0
        %1473 = vmatpush2.msra.mxu0 0.0
        %1474 = vmatprep.subr.mxu0 0.0
        %1475 = vmatpush2.msra.mxu0 0.0
        %1476 = vmatprep.subr.mxu0 0.0
        %1477 = vmatpush2.msra.mxu0 0.0
        %1478 = vmatprep.subr.mxu0 0.0
        %1479 = vmatpush2.msra.mxu0 0.0
        %1480 = vmatprep.subr.mxu0 0.0
        %1481 = vmatpush2.msra.mxu0 0.0
        %1482 = vmatprep.subr.mxu0 0.0
        %1483 = vmatpush2.msra.mxu0 0.0
        %1484 = vmatprep.subr.mxu0 0.0
        %1485 = vmatpush2.msra.mxu0 0.0
        %1486 = vmatprep.subr.mxu0 0.0
        %1487 = vmatpush2.msra.mxu0 0.0
        %1488 = vmatprep.subr.mxu0 0.0
        %1489 = vmatpush2.msra.mxu0 0.0
        %1490 = vmatprep.subr.mxu0 0.0
        %1491 = vmatpush2.msra.mxu0 0.0
        %1492 = vmatprep.subr.mxu0 0.0
        %1493 = vmatpush2.msra.mxu0 0.0
        %1494 = vmatprep.subr.mxu0 0.0
        %1495 = vmatpush2.msra.mxu0 0.0
        %1496 = vmatprep.subr.mxu0 0.0
        %1497 = vmatpush2.msra.mxu0 0.0
        %1498 = vmatprep.subr.mxu0 0.0
        %1499 = vmatpush2.msra.mxu0 0.0
        %1500 = vmatprep.subr.mxu0 0.0
        %1501 = vmatpush2.msra.mxu0 0.0
        %1502 = vmatprep.subr.mxu0 0.0
        %1503 = vmatpush2.msra.mxu0 0.0
        %1504 = vmatprep.mubr.f32.mxu0 0.0
        %1505 = vmatmul.mubr.f32.gmra.mxu0 %v370
        %v1506 = vpop.f32.mrf.mxu0
        %v1507 = vadd.f32 0.0, %v1506
        %v1508 = vpop.f32.mrf.mxu0
        %v1509 = vadd.f32 0.0, %v1508
        %1510 = vdwg.mxu0
        %1511 = vmatprep.subr.mxu0 0.0
        %1512 = vmatpush1.msra.mxu0 0.0
        %1513 = vmatprep.subr.mxu0 0.0
        %1514 = vmatpush1.msra.mxu0 0.0
        %1515 = vmatprep.subr.mxu0 0.0
        %1516 = vmatpush1.msra.mxu0 0.0
        %1517 = vmatprep.subr.mxu0 0.0
        %1518 = vmatpush1.msra.mxu0 0.0
        %1519 = vmatprep.subr.mxu0 0.0
        %1520 = vmatpush1.msra.mxu0 0.0
        %1521 = vmatprep.subr.mxu0 0.0
        %1522 = vmatpush1.msra.mxu0 0.0
        %1523 = vmatprep.subr.mxu0 0.0
        %1524 = vmatpush1.msra.mxu0 0.0
        %1525 = vmatprep.subr.mxu0 0.0
        %1526 = vmatpush1.msra.mxu0 0.0
        %1527 = vmatprep.subr.mxu0 0.0
        %1528 = vmatpush1.msra.mxu0 0.0
        %1529 = vmatprep.subr.mxu0 0.0
        %1530 = vmatpush1.msra.mxu0 0.0
        %1531 = vmatprep.subr.mxu0 0.0
        %1532 = vmatpush1.msra.mxu0 0.0
        %1533 = vmatprep.subr.mxu0 0.0
        %1534 = vmatpush1.msra.mxu0 0.0
        %1535 = vmatprep.subr.mxu0 0.0
        %1536 = vmatpush1.msra.mxu0 0.0
        %1537 = vmatprep.subr.mxu0 0.0
        %1538 = vmatpush1.msra.mxu0 0.0
        %1539 = vmatprep.subr.mxu0 0.0
        %1540 = vmatpush1.msra.mxu0 0.0
        %1541 = vmatprep.subr.mxu0 %v921
        %1542 = vmatpush1.msra.mxu0 %v919
        %1543 = vmatprep.subr.mxu0 0.0
        %1544 = vmatpush2.msra.mxu0 0.0
        %1545 = vmatprep.subr.mxu0 0.0
        %1546 = vmatpush2.msra.mxu0 0.0
        %1547 = vmatprep.subr.mxu0 0.0
        %1548 = vmatpush2.msra.mxu0 0.0
        %1549 = vmatprep.subr.mxu0 0.0
        %1550 = vmatpush2.msra.mxu0 0.0
        %1551 = vmatprep.subr.mxu0 0.0
        %1552 = vmatpush2.msra.mxu0 0.0
        %1553 = vmatprep.subr.mxu0 0.0
        %1554 = vmatpush2.msra.mxu0 0.0
        %1555 = vmatprep.subr.mxu0 0.0
        %1556 = vmatpush2.msra.mxu0 0.0
        %1557 = vmatprep.subr.mxu0 0.0
        %1558 = vmatpush2.msra.mxu0 0.0
        %1559 = vmatprep.subr.mxu0 0.0
        %1560 = vmatpush2.msra.mxu0 0.0
        %1561 = vmatprep.subr.mxu0 0.0
        %1562 = vmatpush2.msra.mxu0 0.0
        %1563 = vmatprep.subr.mxu0 0.0
        %1564 = vmatpush2.msra.mxu0 0.0
        %1565 = vmatprep.subr.mxu0 0.0
        %1566 = vmatpush2.msra.mxu0 0.0
        %1567 = vmatprep.subr.mxu0 0.0
        %1568 = vmatpush2.msra.mxu0 0.0
        %1569 = vmatprep.subr.mxu0 0.0
        %1570 = vmatpush2.msra.mxu0 0.0
        %1571 = vmatprep.subr.mxu0 0.0
        %1572 = vmatpush2.msra.mxu0 0.0
        %1573 = vmatprep.subr.mxu0 0.0
        %1574 = vmatpush2.msra.mxu0 0.0
        %1575 = vmatprep.mubr.f32.mxu0 0.0
        %1576 = vmatmul.mubr.f32.gmra.mxu0 %v370
        %v1577 = vpop.f32.mrf.mxu0
        %v1578 = vadd.f32 0.0, %v1577
        %v1579 = vpop.f32.mrf.mxu0
        %v1580 = vadd.f32 0.0, %v1579
        %1581 = vdwg.mxu0
        %1582 = vmatprep.subr.mxu0 0.0
        %1583 = vmatpush1.msra.mxu0 0.0
        %1584 = vmatprep.subr.mxu0 0.0
        %1585 = vmatpush1.msra.mxu0 0.0
        %1586 = vmatprep.subr.mxu0 0.0
        %1587 = vmatpush1.msra.mxu0 0.0
        %1588 = vmatprep.subr.mxu0 0.0
        %1589 = vmatpush1.msra.mxu0 0.0
        %1590 = vmatprep.subr.mxu0 0.0
        %1591 = vmatpush1.msra.mxu0 0.0
        %1592 = vmatprep.subr.mxu0 0.0
        %1593 = vmatpush1.msra.mxu0 0.0
        %1594 = vmatprep.subr.mxu0 0.0
        %1595 = vmatpush1.msra.mxu0 0.0
        %1596 = vmatprep.subr.mxu0 0.0
        %1597 = vmatpush1.msra.mxu0 0.0
        %1598 = vmatprep.subr.mxu0 0.0
        %1599 = vmatpush1.msra.mxu0 0.0
        %1600 = vmatprep.subr.mxu0 0.0
        %1601 = vmatpush1.msra.mxu0 0.0
        %1602 = vmatprep.subr.mxu0 0.0
        %1603 = vmatpush1.msra.mxu0 0.0
        %1604 = vmatprep.subr.mxu0 0.0
        %1605 = vmatpush1.msra.mxu0 0.0
        %1606 = vmatprep.subr.mxu0 0.0
        %1607 = vmatpush1.msra.mxu0 0.0
        %1608 = vmatprep.subr.mxu0 0.0
        %1609 = vmatpush1.msra.mxu0 0.0
        %1610 = vmatprep.subr.mxu0 0.0
        %1611 = vmatpush1.msra.mxu0 0.0
        %1612 = vmatprep.subr.mxu0 %v925
        %1613 = vmatpush1.msra.mxu0 %v923
        %1614 = vmatprep.subr.mxu0 0.0
        %1615 = vmatpush2.msra.mxu0 0.0
        %1616 = vmatprep.subr.mxu0 0.0
        %1617 = vmatpush2.msra.mxu0 0.0
        %1618 = vmatprep.subr.mxu0 0.0
        %1619 = vmatpush2.msra.mxu0 0.0
        %1620 = vmatprep.subr.mxu0 0.0
        %1621 = vmatpush2.msra.mxu0 0.0
        %1622 = vmatprep.subr.mxu0 0.0
        %1623 = vmatpush2.msra.mxu0 0.0
        %1624 = vmatprep.subr.mxu0 0.0
        %1625 = vmatpush2.msra.mxu0 0.0
        %1626 = vmatprep.subr.mxu0 0.0
        %1627 = vmatpush2.msra.mxu0 0.0
        %1628 = vmatprep.subr.mxu0 0.0
        %1629 = vmatpush2.msra.mxu0 0.0
        %1630 = vmatprep.subr.mxu0 0.0
        %1631 = vmatpush2.msra.mxu0 0.0
        %1632 = vmatprep.subr.mxu0 0.0
        %1633 = vmatpush2.msra.mxu0 0.0
        %1634 = vmatprep.subr.mxu0 0.0
        %1635 = vmatpush2.msra.mxu0 0.0
        %1636 = vmatprep.subr.mxu0 0.0
        %1637 = vmatpush2.msra.mxu0 0.0
        %1638 = vmatprep.subr.mxu0 0.0
        %1639 = vmatpush2.msra.mxu0 0.0
        %1640 = vmatprep.subr.mxu0 0.0
        %1641 = vmatpush2.msra.mxu0 0.0
        %1642 = vmatprep.subr.mxu0 0.0
        %1643 = vmatpush2.msra.mxu0 0.0
        %1644 = vmatprep.subr.mxu0 0.0
        %1645 = vmatpush2.msra.mxu0 0.0
        %1646 = vmatprep.mubr.f32.mxu0 0.0
        %1647 = vmatmul.mubr.f32.gmra.mxu0 %v370
        %v1648 = vpop.f32.mrf.mxu0
        %v1649 = vadd.f32 0.0, %v1648
        %v1650 = vpop.f32.mrf.mxu0
        %v1651 = vadd.f32 0.0, %v1650
        %1652 = vdwg.mxu0
        %1653 = vmatprep.subr.mxu0 0.0
        %1654 = vmatpush1.msra.mxu0 0.0
        %1655 = vmatprep.subr.mxu0 0.0
        %1656 = vmatpush1.msra.mxu0 0.0
        %1657 = vmatprep.subr.mxu0 0.0
        %1658 = vmatpush1.msra.mxu0 0.0
        %1659 = vmatprep.subr.mxu0 0.0
        %1660 = vmatpush1.msra.mxu0 0.0
        %1661 = vmatprep.subr.mxu0 0.0
        %1662 = vmatpush1.msra.mxu0 0.0
        %1663 = vmatprep.subr.mxu0 0.0
        %1664 = vmatpush1.msra.mxu0 0.0
        %1665 = vmatprep.subr.mxu0 0.0
        %1666 = vmatpush1.msra.mxu0 0.0
        %1667 = vmatprep.subr.mxu0 0.0
        %1668 = vmatpush1.msra.mxu0 0.0
        %1669 = vmatprep.subr.mxu0 0.0
        %1670 = vmatpush1.msra.mxu0 0.0
        %1671 = vmatprep.subr.mxu0 0.0
        %1672 = vmatpush1.msra.mxu0 0.0
        %1673 = vmatprep.subr.mxu0 0.0
        %1674 = vmatpush1.msra.mxu0 0.0
        %1675 = vmatprep.subr.mxu0 0.0
        %1676 = vmatpush1.msra.mxu0 0.0
        %1677 = vmatprep.subr.mxu0 0.0
        %1678 = vmatpush1.msra.mxu0 0.0
        %1679 = vmatprep.subr.mxu0 0.0
        %1680 = vmatpush1.msra.mxu0 0.0
        %1681 = vmatprep.subr.mxu0 0.0
        %1682 = vmatpush1.msra.mxu0 0.0
        %1683 = vmatprep.subr.mxu0 %v929
        %1684 = vmatpush1.msra.mxu0 %v927
        %1685 = vmatprep.subr.mxu0 0.0
        %1686 = vmatpush2.msra.mxu0 0.0
        %1687 = vmatprep.subr.mxu0 0.0
        %1688 = vmatpush2.msra.mxu0 0.0
        %1689 = vmatprep.subr.mxu0 0.0
        %1690 = vmatpush2.msra.mxu0 0.0
        %1691 = vmatprep.subr.mxu0 0.0
        %1692 = vmatpush2.msra.mxu0 0.0
        %1693 = vmatprep.subr.mxu0 0.0
        %1694 = vmatpush2.msra.mxu0 0.0
        %1695 = vmatprep.subr.mxu0 0.0
        %1696 = vmatpush2.msra.mxu0 0.0
        %1697 = vmatprep.subr.mxu0 0.0
        %1698 = vmatpush2.msra.mxu0 0.0
        %1699 = vmatprep.subr.mxu0 0.0
        %1700 = vmatpush2.msra.mxu0 0.0
        %1701 = vmatprep.subr.mxu0 0.0
        %1702 = vmatpush2.msra.mxu0 0.0
        %1703 = vmatprep.subr.mxu0 0.0
        %1704 = vmatpush2.msra.mxu0 0.0
        %1705 = vmatprep.subr.mxu0 0.0
        %1706 = vmatpush2.msra.mxu0 0.0
        %1707 = vmatprep.subr.mxu0 0.0
        %1708 = vmatpush2.msra.mxu0 0.0
        %1709 = vmatprep.subr.mxu0 0.0
        %1710 = vmatpush2.msra.mxu0 0.0
        %1711 = vmatprep.subr.mxu0 0.0
        %1712 = vmatpush2.msra.mxu0 0.0
        %1713 = vmatprep.subr.mxu0 0.0
        %1714 = vmatpush2.msra.mxu0 0.0
        %1715 = vmatprep.subr.mxu0 0.0
        %1716 = vmatpush2.msra.mxu0 0.0
        %1717 = vmatprep.mubr.f32.mxu0 0.0
        %1718 = vmatmul.mubr.f32.gmra.mxu0 %v370
        %v1719 = vpop.f32.mrf.mxu0
        %v1720 = vadd.f32 0.0, %v1719
        %v1721 = vpop.f32.mrf.mxu0
        %v1722 = vadd.f32 0.0, %v1721
        %1723 = vdwg.mxu0
        %1724 = vmatprep.subr.mxu0 0.0
        %1725 = vmatpush1.msra.mxu0 0.0
        %1726 = vmatprep.subr.mxu0 0.0
        %1727 = vmatpush1.msra.mxu0 0.0
        %1728 = vmatprep.subr.mxu0 0.0
        %1729 = vmatpush1.msra.mxu0 0.0
        %1730 = vmatprep.subr.mxu0 0.0
        %1731 = vmatpush1.msra.mxu0 0.0
        %1732 = vmatprep.subr.mxu0 0.0
        %1733 = vmatpush1.msra.mxu0 0.0
        %1734 = vmatprep.subr.mxu0 0.0
        %1735 = vmatpush1.msra.mxu0 0.0
        %1736 = vmatprep.subr.mxu0 0.0
        %1737 = vmatpush1.msra.mxu0 0.0
        %1738 = vmatprep.subr.mxu0 0.0
        %1739 = vmatpush1.msra.mxu0 0.0
        %1740 = vmatprep.subr.mxu0 0.0
        %1741 = vmatpush1.msra.mxu0 0.0
        %1742 = vmatprep.subr.mxu0 0.0
        %1743 = vmatpush1.msra.mxu0 0.0
        %1744 = vmatprep.subr.mxu0 0.0
        %1745 = vmatpush1.msra.mxu0 0.0
        %1746 = vmatprep.subr.mxu0 0.0
        %1747 = vmatpush1.msra.mxu0 0.0
        %1748 = vmatprep.subr.mxu0 0.0
        %1749 = vmatpush1.msra.mxu0 0.0
        %1750 = vmatprep.subr.mxu0 0.0
        %1751 = vmatpush1.msra.mxu0 0.0
        %1752 = vmatprep.subr.mxu0 0.0
        %1753 = vmatpush1.msra.mxu0 0.0
        %1754 = vmatprep.subr.mxu0 %v933
        %1755 = vmatpush1.msra.mxu0 %v931
        %1756 = vmatprep.subr.mxu0 0.0
        %1757 = vmatpush2.msra.mxu0 0.0
        %1758 = vmatprep.subr.mxu0 0.0
        %1759 = vmatpush2.msra.mxu0 0.0
        %1760 = vmatprep.subr.mxu0 0.0
        %1761 = vmatpush2.msra.mxu0 0.0
        %1762 = vmatprep.subr.mxu0 0.0
        %1763 = vmatpush2.msra.mxu0 0.0
        %1764 = vmatprep.subr.mxu0 0.0
        %1765 = vmatpush2.msra.mxu0 0.0
        %1766 = vmatprep.subr.mxu0 0.0
        %1767 = vmatpush2.msra.mxu0 0.0
        %1768 = vmatprep.subr.mxu0 0.0
        %1769 = vmatpush2.msra.mxu0 0.0
        %1770 = vmatprep.subr.mxu0 0.0
        %1771 = vmatpush2.msra.mxu0 0.0
        %1772 = vmatprep.subr.mxu0 0.0
        %1773 = vmatpush2.msra.mxu0 0.0
        %1774 = vmatprep.subr.mxu0 0.0
        %1775 = vmatpush2.msra.mxu0 0.0
        %1776 = vmatprep.subr.mxu0 0.0
        %1777 = vmatpush2.msra.mxu0 0.0
        %1778 = vmatprep.subr.mxu0 0.0
        %1779 = vmatpush2.msra.mxu0 0.0
        %1780 = vmatprep.subr.mxu0 0.0
        %1781 = vmatpush2.msra.mxu0 0.0
        %1782 = vmatprep.subr.mxu0 0.0
        %1783 = vmatpush2.msra.mxu0 0.0
        %1784 = vmatprep.subr.mxu0 0.0
        %1785 = vmatpush2.msra.mxu0 0.0
        %1786 = vmatprep.subr.mxu0 0.0
        %1787 = vmatpush2.msra.mxu0 0.0
        %1788 = vmatprep.mubr.f32.mxu0 0.0
        %1789 = vmatmul.mubr.f32.gmra.mxu0 %v370
        %v1790 = vpop.f32.mrf.mxu0
        %v1791 = vadd.f32 0.0, %v1790
        %v1792 = vpop.f32.mrf.mxu0
        %v1793 = vadd.f32 0.0, %v1792
        %1794 = vdwg.mxu0
        %1795 = vmatprep.subr.mxu0 0.0
        %1796 = vmatpush1.msra.mxu0 0.0
        %1797 = vmatprep.subr.mxu0 0.0
        %1798 = vmatpush1.msra.mxu0 0.0
        %1799 = vmatprep.subr.mxu0 0.0
        %1800 = vmatpush1.msra.mxu0 0.0
        %1801 = vmatprep.subr.mxu0 0.0
        %1802 = vmatpush1.msra.mxu0 0.0
        %1803 = vmatprep.subr.mxu0 0.0
        %1804 = vmatpush1.msra.mxu0 0.0
        %1805 = vmatprep.subr.mxu0 0.0
        %1806 = vmatpush1.msra.mxu0 0.0
        %1807 = vmatprep.subr.mxu0 0.0
        %1808 = vmatpush1.msra.mxu0 0.0
        %1809 = vmatprep.subr.mxu0 0.0
        %1810 = vmatpush1.msra.mxu0 0.0
        %1811 = vmatprep.subr.mxu0 0.0
        %1812 = vmatpush1.msra.mxu0 0.0
        %1813 = vmatprep.subr.mxu0 0.0
        %1814 = vmatpush1.msra.mxu0 0.0
        %1815 = vmatprep.subr.mxu0 0.0
        %1816 = vmatpush1.msra.mxu0 0.0
        %1817 = vmatprep.subr.mxu0 0.0
        %1818 = vmatpush1.msra.mxu0 0.0
        %1819 = vmatprep.subr.mxu0 0.0
        %1820 = vmatpush1.msra.mxu0 0.0
        %1821 = vmatprep.subr.mxu0 0.0
        %1822 = vmatpush1.msra.mxu0 0.0
        %1823 = vmatprep.subr.mxu0 0.0
        %1824 = vmatpush1.msra.mxu0 0.0
        %1825 = vmatprep.subr.mxu0 %v937
        %1826 = vmatpush1.msra.mxu0 %v935
        %1827 = vmatprep.subr.mxu0 0.0
        %1828 = vmatpush2.msra.mxu0 0.0
        %1829 = vmatprep.subr.mxu0 0.0
        %1830 = vmatpush2.msra.mxu0 0.0
        %1831 = vmatprep.subr.mxu0 0.0
        %1832 = vmatpush2.msra.mxu0 0.0
        %1833 = vmatprep.subr.mxu0 0.0
        %1834 = vmatpush2.msra.mxu0 0.0
        %1835 = vmatprep.subr.mxu0 0.0
        %1836 = vmatpush2.msra.mxu0 0.0
        %1837 = vmatprep.subr.mxu0 0.0
        %1838 = vmatpush2.msra.mxu0 0.0
        %1839 = vmatprep.subr.mxu0 0.0
        %1840 = vmatpush2.msra.mxu0 0.0
        %1841 = vmatprep.subr.mxu0 0.0
        %1842 = vmatpush2.msra.mxu0 0.0
        %1843 = vmatprep.subr.mxu0 0.0
        %1844 = vmatpush2.msra.mxu0 0.0
        %1845 = vmatprep.subr.mxu0 0.0
        %1846 = vmatpush2.msra.mxu0 0.0
        %1847 = vmatprep.subr.mxu0 0.0
        %1848 = vmatpush2.msra.mxu0 0.0
        %1849 = vmatprep.subr.mxu0 0.0
        %1850 = vmatpush2.msra.mxu0 0.0
        %1851 = vmatprep.subr.mxu0 0.0
        %1852 = vmatpush2.msra.mxu0 0.0
        %1853 = vmatprep.subr.mxu0 0.0
        %1854 = vmatpush2.msra.mxu0 0.0
        %1855 = vmatprep.subr.mxu0 0.0
        %1856 = vmatpush2.msra.mxu0 0.0
        %1857 = vmatprep.subr.mxu0 0.0
        %1858 = vmatpush2.msra.mxu0 0.0
        %1859 = vmatprep.mubr.f32.mxu0 0.0
        %1860 = vmatmul.mubr.f32.gmra.mxu0 %v370
        %v1861 = vpop.f32.mrf.mxu0
        %v1862 = vadd.f32 0.0, %v1861
        %v1863 = vpop.f32.mrf.mxu0
        %v1864 = vadd.f32 0.0, %v1863
        %1865 = vdwg.mxu0
        %1866 = vmatprep.subr.mxu0 0.0
        %1867 = vmatpush1.msra.mxu0 0.0
        %1868 = vmatprep.subr.mxu0 0.0
        %1869 = vmatpush1.msra.mxu0 0.0
        %1870 = vmatprep.subr.mxu0 0.0
        %1871 = vmatpush1.msra.mxu0 0.0
        %1872 = vmatprep.subr.mxu0 0.0
        %1873 = vmatpush1.msra.mxu0 0.0
        %1874 = vmatprep.subr.mxu0 0.0
        %1875 = vmatpush1.msra.mxu0 0.0
        %1876 = vmatprep.subr.mxu0 0.0
        %1877 = vmatpush1.msra.mxu0 0.0
        %1878 = vmatprep.subr.mxu0 0.0
        %1879 = vmatpush1.msra.mxu0 0.0
        %1880 = vmatprep.subr.mxu0 0.0
        %1881 = vmatpush1.msra.mxu0 0.0
        %1882 = vmatprep.subr.mxu0 0.0
        %1883 = vmatpush1.msra.mxu0 0.0
        %1884 = vmatprep.subr.mxu0 0.0
        %1885 = vmatpush1.msra.mxu0 0.0
        %1886 = vmatprep.subr.mxu0 0.0
        %1887 = vmatpush1.msra.mxu0 0.0
        %1888 = vmatprep.subr.mxu0 0.0
        %1889 = vmatpush1.msra.mxu0 0.0
        %1890 = vmatprep.subr.mxu0 0.0
        %1891 = vmatpush1.msra.mxu0 0.0
        %1892 = vmatprep.subr.mxu0 0.0
        %1893 = vmatpush1.msra.mxu0 0.0
        %1894 = vmatprep.subr.mxu0 0.0
        %1895 = vmatpush1.msra.mxu0 0.0
        %1896 = vmatprep.subr.mxu0 %v941
        %1897 = vmatpush1.msra.mxu0 %v939
        %1898 = vmatprep.subr.mxu0 0.0
        %1899 = vmatpush2.msra.mxu0 0.0
        %1900 = vmatprep.subr.mxu0 0.0
        %1901 = vmatpush2.msra.mxu0 0.0
        %1902 = vmatprep.subr.mxu0 0.0
        %1903 = vmatpush2.msra.mxu0 0.0
        %1904 = vmatprep.subr.mxu0 0.0
        %1905 = vmatpush2.msra.mxu0 0.0
        %1906 = vmatprep.subr.mxu0 0.0
        %1907 = vmatpush2.msra.mxu0 0.0
        %1908 = vmatprep.subr.mxu0 0.0
        %1909 = vmatpush2.msra.mxu0 0.0
        %1910 = vmatprep.subr.mxu0 0.0
        %1911 = vmatpush2.msra.mxu0 0.0
        %1912 = vmatprep.subr.mxu0 0.0
        %1913 = vmatpush2.msra.mxu0 0.0
        %1914 = vmatprep.subr.mxu0 0.0
        %1915 = vmatpush2.msra.mxu0 0.0
        %1916 = vmatprep.subr.mxu0 0.0
        %1917 = vmatpush2.msra.mxu0 0.0
        %1918 = vmatprep.subr.mxu0 0.0
        %1919 = vmatpush2.msra.mxu0 0.0
        %1920 = vmatprep.subr.mxu0 0.0
        %1921 = vmatpush2.msra.mxu0 0.0
        %1922 = vmatprep.subr.mxu0 0.0
        %1923 = vmatpush2.msra.mxu0 0.0
        %1924 = vmatprep.subr.mxu0 0.0
        %1925 = vmatpush2.msra.mxu0 0.0
        %1926 = vmatprep.subr.mxu0 0.0
        %1927 = vmatpush2.msra.mxu0 0.0
        %1928 = vmatprep.subr.mxu0 0.0
        %1929 = vmatpush2.msra.mxu0 0.0
        %1930 = vmatprep.mubr.f32.mxu0 0.0
        %1931 = vmatmul.mubr.f32.gmra.mxu0 %v370
        %v1932 = vpop.f32.mrf.mxu0
        %v1933 = vadd.f32 0.0, %v1932
        %v1934 = vpop.f32.mrf.mxu0
        %v1935 = vadd.f32 0.0, %v1934
        %1936 = vdwg.mxu0
        %v1937 = vsub.f32 %v468, %v1010
        %v1938 = vsub.f32 %v470, %v1012
        %v1939 = vsub.f32 %v539, %v1081
        %v1940 = vsub.f32 %v541, %v1083
        %v1941 = vsub.f32 %v610, %v1152
        %v1942 = vsub.f32 %v612, %v1154
        %v1943 = vsub.f32 %v681, %v1223
        %v1944 = vsub.f32 %v683, %v1225
        %v1945 = vsub.f32 %v752, %v1294
        %v1946 = vsub.f32 %v754, %v1296
        %v1947 = vsub.f32 %v823, %v1365
        %v1948 = vsub.f32 %v825, %v1367
        %v1949 = vsub.f32 %v894, %v1436
        %v1950 = vsub.f32 %v896, %v1438
        %v1965 = vcombine.low %v1937, %v1938
        %v1966 = vcombine.low %v1939, %v1940
        %v1967 = vcombine.low %v1941, %v1942
        %v1968 = vcombine.low %v1943, %v1944
        %v1969 = vcombine.low %v1945, %v1946
        %v1970 = vcombine.low %v1947, %v1948
        %v1971 = vcombine.low %v1949, %v1950
        %1979 = vst [vmem:[%s326] sm:$0x77] %v1965
        %1980 = vst [vmem:[%s326 + $0x8] sm:$0x77] %v1966
        %1981 = vst [vmem:[%s326 + $0x10] sm:$0x77] %v1967
        %1982 = vst [vmem:[%s326 + $0x18] sm:$0x77] %v1968
        %1983 = vst [vmem:[%s326 + $0x20] sm:$0x77] %v1969
        %1984 = vst [vmem:[%s326 + $0x28] sm:$0x77] %v1970
        %vm1985 = vcmask 522244
        %vm1986 = vmor %vm1985, %vm372
        %1987 = vst.msk [vmem:[%s326 + $0x30] sm:$0x77] %vm1986, %v1971
        %1988 = vmatprep.subr.mxu0 0.0
        %1989 = vmatpush1.msra.mxu0 0.0
        %1990 = vmatprep.subr.mxu0 0.0
        %1991 = vmatpush1.msra.mxu0 0.0
        %1992 = vmatprep.subr.mxu0 0.0
        %1993 = vmatpush1.msra.mxu0 0.0
        %1994 = vmatprep.subr.mxu0 0.0
        %1995 = vmatpush1.msra.mxu0 0.0
        %1996 = vmatprep.subr.mxu0 0.0
        %1997 = vmatpush1.msra.mxu0 0.0
        %1998 = vmatprep.subr.mxu0 0.0
        %1999 = vmatpush1.msra.mxu0 0.0
        %2000 = vmatprep.subr.mxu0 0.0
        %2001 = vmatpush1.msra.mxu0 0.0
        %2002 = vmatprep.subr.mxu0 0.0
        %2003 = vmatpush1.msra.mxu0 0.0
        %2004 = vmatprep.subr.mxu0 0.0
        %2005 = vmatpush1.msra.mxu0 0.0
        %2006 = vmatprep.subr.mxu0 0.0
        %2007 = vmatpush1.msra.mxu0 0.0
        %2008 = vmatprep.subr.mxu0 0.0
        %2009 = vmatpush1.msra.mxu0 0.0
        %2010 = vmatprep.subr.mxu0 0.0
        %2011 = vmatpush1.msra.mxu0 0.0
        %2012 = vmatprep.subr.mxu0 0.0
        %2013 = vmatpush1.msra.mxu0 0.0
        %2014 = vmatprep.subr.mxu0 0.0
        %2015 = vmatpush1.msra.mxu0 0.0
        %2016 = vmatprep.subr.mxu0 0.0
        %2017 = vmatpush1.msra.mxu0 0.0
        %2018 = vmatprep.subr.mxu0 %v375
        %2019 = vmatpush1.msra.mxu0 %v373
        %2020 = vmatprep.subr.mxu0 0.0
        %2021 = vmatpush2.msra.mxu0 0.0
        %2022 = vmatprep.subr.mxu0 0.0
        %2023 = vmatpush2.msra.mxu0 0.0
        %2024 = vmatprep.subr.mxu0 0.0
        %2025 = vmatpush2.msra.mxu0 0.0
        %2026 = vmatprep.subr.mxu0 0.0
        %2027 = vmatpush2.msra.mxu0 0.0
        %2028 = vmatprep.subr.mxu0 0.0
        %2029 = vmatpush2.msra.mxu0 0.0
        %2030 = vmatprep.subr.mxu0 0.0
        %2031 = vmatpush2.msra.mxu0 0.0
        %2032 = vmatprep.subr.mxu0 0.0
        %2033 = vmatpush2.msra.mxu0 0.0
        %2034 = vmatprep.subr.mxu0 0.0
        %2035 = vmatpush2.msra.mxu0 0.0
        %2036 = vmatprep.subr.mxu0 0.0
        %2037 = vmatpush2.msra.mxu0 0.0
        %2038 = vmatprep.subr.mxu0 0.0
        %2039 = vmatpush2.msra.mxu0 0.0
        %2040 = vmatprep.subr.mxu0 0.0
        %2041 = vmatpush2.msra.mxu0 0.0
        %2042 = vmatprep.subr.mxu0 0.0
        %2043 = vmatpush2.msra.mxu0 0.0
        %2044 = vmatprep.subr.mxu0 0.0
        %2045 = vmatpush2.msra.mxu0 0.0
        %2046 = vmatprep.subr.mxu0 0.0
        %2047 = vmatpush2.msra.mxu0 0.0
        %2048 = vmatprep.subr.mxu0 0.0
        %2049 = vmatpush2.msra.mxu0 0.0
        %2050 = vmatprep.subr.mxu0 0.0
        %2051 = vmatpush2.msra.mxu0 0.0
        %2052 = vmatprep.mubr.f32.mxu0 0.0
        %2053 = vmatmul.mubr.f32.gmra.mxu0 %v913
        %v2054 = vpop.f32.mrf.mxu0
        %v2055 = vadd.f32 %v1507, %v2054
        %v2056 = vpop.f32.mrf.mxu0
        %v2057 = vadd.f32 %v1509, %v2056
        %2058 = vdwg.mxu0
        %2059 = vmatprep.subr.mxu0 0.0
        %2060 = vmatpush1.msra.mxu0 0.0
        %2061 = vmatprep.subr.mxu0 0.0
        %2062 = vmatpush1.msra.mxu0 0.0
        %2063 = vmatprep.subr.mxu0 0.0
        %2064 = vmatpush1.msra.mxu0 0.0
        %2065 = vmatprep.subr.mxu0 0.0
        %2066 = vmatpush1.msra.mxu0 0.0
        %2067 = vmatprep.subr.mxu0 0.0
        %2068 = vmatpush1.msra.mxu0 0.0
        %2069 = vmatprep.subr.mxu0 0.0
        %2070 = vmatpush1.msra.mxu0 0.0
        %2071 = vmatprep.subr.mxu0 0.0
        %2072 = vmatpush1.msra.mxu0 0.0
        %2073 = vmatprep.subr.mxu0 0.0
        %2074 = vmatpush1.msra.mxu0 0.0
        %2075 = vmatprep.subr.mxu0 0.0
        %2076 = vmatpush1.msra.mxu0 0.0
        %2077 = vmatprep.subr.mxu0 0.0
        %2078 = vmatpush1.msra.mxu0 0.0
        %2079 = vmatprep.subr.mxu0 0.0
        %2080 = vmatpush1.msra.mxu0 0.0
        %2081 = vmatprep.subr.mxu0 0.0
        %2082 = vmatpush1.msra.mxu0 0.0
        %2083 = vmatprep.subr.mxu0 0.0
        %2084 = vmatpush1.msra.mxu0 0.0
        %2085 = vmatprep.subr.mxu0 0.0
        %2086 = vmatpush1.msra.mxu0 0.0
        %2087 = vmatprep.subr.mxu0 0.0
        %2088 = vmatpush1.msra.mxu0 0.0
        %2089 = vmatprep.subr.mxu0 %v379
        %2090 = vmatpush1.msra.mxu0 %v377
        %2091 = vmatprep.subr.mxu0 0.0
        %2092 = vmatpush2.msra.mxu0 0.0
        %2093 = vmatprep.subr.mxu0 0.0
        %2094 = vmatpush2.msra.mxu0 0.0
        %2095 = vmatprep.subr.mxu0 0.0
        %2096 = vmatpush2.msra.mxu0 0.0
        %2097 = vmatprep.subr.mxu0 0.0
        %2098 = vmatpush2.msra.mxu0 0.0
        %2099 = vmatprep.subr.mxu0 0.0
        %2100 = vmatpush2.msra.mxu0 0.0
        %2101 = vmatprep.subr.mxu0 0.0
        %2102 = vmatpush2.msra.mxu0 0.0
        %2103 = vmatprep.subr.mxu0 0.0
        %2104 = vmatpush2.msra.mxu0 0.0
        %2105 = vmatprep.subr.mxu0 0.0
        %2106 = vmatpush2.msra.mxu0 0.0
        %2107 = vmatprep.subr.mxu0 0.0
        %2108 = vmatpush2.msra.mxu0 0.0
        %2109 = vmatprep.subr.mxu0 0.0
        %2110 = vmatpush2.msra.mxu0 0.0
        %2111 = vmatprep.subr.mxu0 0.0
        %2112 = vmatpush2.msra.mxu0 0.0
        %2113 = vmatprep.subr.mxu0 0.0
        %2114 = vmatpush2.msra.mxu0 0.0
        %2115 = vmatprep.subr.mxu0 0.0
        %2116 = vmatpush2.msra.mxu0 0.0
        %2117 = vmatprep.subr.mxu0 0.0
        %2118 = vmatpush2.msra.mxu0 0.0
        %2119 = vmatprep.subr.mxu0 0.0
        %2120 = vmatpush2.msra.mxu0 0.0
        %2121 = vmatprep.subr.mxu0 0.0
        %2122 = vmatpush2.msra.mxu0 0.0
        %2123 = vmatprep.mubr.f32.mxu0 0.0
        %2124 = vmatmul.mubr.f32.gmra.mxu0 %v913
        %v2125 = vpop.f32.mrf.mxu0
        %v2126 = vadd.f32 %v1578, %v2125
        %v2127 = vpop.f32.mrf.mxu0
        %v2128 = vadd.f32 %v1580, %v2127
        %2129 = vdwg.mxu0
        %2130 = vmatprep.subr.mxu0 0.0
        %2131 = vmatpush1.msra.mxu0 0.0
        %2132 = vmatprep.subr.mxu0 0.0
        %2133 = vmatpush1.msra.mxu0 0.0
        %2134 = vmatprep.subr.mxu0 0.0
        %2135 = vmatpush1.msra.mxu0 0.0
        %2136 = vmatprep.subr.mxu0 0.0
        %2137 = vmatpush1.msra.mxu0 0.0
        %2138 = vmatprep.subr.mxu0 0.0
        %2139 = vmatpush1.msra.mxu0 0.0
        %2140 = vmatprep.subr.mxu0 0.0
        %2141 = vmatpush1.msra.mxu0 0.0
        %2142 = vmatprep.subr.mxu0 0.0
        %2143 = vmatpush1.msra.mxu0 0.0
        %2144 = vmatprep.subr.mxu0 0.0
        %2145 = vmatpush1.msra.mxu0 0.0
        %2146 = vmatprep.subr.mxu0 0.0
        %2147 = vmatpush1.msra.mxu0 0.0
        %2148 = vmatprep.subr.mxu0 0.0
        %2149 = vmatpush1.msra.mxu0 0.0
        %2150 = vmatprep.subr.mxu0 0.0
        %2151 = vmatpush1.msra.mxu0 0.0
        %2152 = vmatprep.subr.mxu0 0.0
        %2153 = vmatpush1.msra.mxu0 0.0
        %2154 = vmatprep.subr.mxu0 0.0
        %2155 = vmatpush1.msra.mxu0 0.0
        %2156 = vmatprep.subr.mxu0 0.0
        %2157 = vmatpush1.msra.mxu0 0.0
        %2158 = vmatprep.subr.mxu0 0.0
        %2159 = vmatpush1.msra.mxu0 0.0
        %2160 = vmatprep.subr.mxu0 %v383
        %2161 = vmatpush1.msra.mxu0 %v381
        %2162 = vmatprep.subr.mxu0 0.0
        %2163 = vmatpush2.msra.mxu0 0.0
        %2164 = vmatprep.subr.mxu0 0.0
        %2165 = vmatpush2.msra.mxu0 0.0
        %2166 = vmatprep.subr.mxu0 0.0
        %2167 = vmatpush2.msra.mxu0 0.0
        %2168 = vmatprep.subr.mxu0 0.0
        %2169 = vmatpush2.msra.mxu0 0.0
        %2170 = vmatprep.subr.mxu0 0.0
        %2171 = vmatpush2.msra.mxu0 0.0
        %2172 = vmatprep.subr.mxu0 0.0
        %2173 = vmatpush2.msra.mxu0 0.0
        %2174 = vmatprep.subr.mxu0 0.0
        %2175 = vmatpush2.msra.mxu0 0.0
        %2176 = vmatprep.subr.mxu0 0.0
        %2177 = vmatpush2.msra.mxu0 0.0
        %2178 = vmatprep.subr.mxu0 0.0
        %2179 = vmatpush2.msra.mxu0 0.0
        %2180 = vmatprep.subr.mxu0 0.0
        %2181 = vmatpush2.msra.mxu0 0.0
        %2182 = vmatprep.subr.mxu0 0.0
        %2183 = vmatpush2.msra.mxu0 0.0
        %2184 = vmatprep.subr.mxu0 0.0
        %2185 = vmatpush2.msra.mxu0 0.0
        %2186 = vmatprep.subr.mxu0 0.0
        %2187 = vmatpush2.msra.mxu0 0.0
        %2188 = vmatprep.subr.mxu0 0.0
        %2189 = vmatpush2.msra.mxu0 0.0
        %2190 = vmatprep.subr.mxu0 0.0
        %2191 = vmatpush2.msra.mxu0 0.0
        %2192 = vmatprep.subr.mxu0 0.0
        %2193 = vmatpush2.msra.mxu0 0.0
        %2194 = vmatprep.mubr.f32.mxu0 0.0
        %2195 = vmatmul.mubr.f32.gmra.mxu0 %v913
        %v2196 = vpop.f32.mrf.mxu0
        %v2197 = vadd.f32 %v1649, %v2196
        %v2198 = vpop.f32.mrf.mxu0
        %v2199 = vadd.f32 %v1651, %v2198
        %2200 = vdwg.mxu0
        %2201 = vmatprep.subr.mxu0 0.0
        %2202 = vmatpush1.msra.mxu0 0.0
        %2203 = vmatprep.subr.mxu0 0.0
        %2204 = vmatpush1.msra.mxu0 0.0
        %2205 = vmatprep.subr.mxu0 0.0
        %2206 = vmatpush1.msra.mxu0 0.0
        %2207 = vmatprep.subr.mxu0 0.0
        %2208 = vmatpush1.msra.mxu0 0.0
        %2209 = vmatprep.subr.mxu0 0.0
        %2210 = vmatpush1.msra.mxu0 0.0
        %2211 = vmatprep.subr.mxu0 0.0
        %2212 = vmatpush1.msra.mxu0 0.0
        %2213 = vmatprep.subr.mxu0 0.0
        %2214 = vmatpush1.msra.mxu0 0.0
        %2215 = vmatprep.subr.mxu0 0.0
        %2216 = vmatpush1.msra.mxu0 0.0
        %2217 = vmatprep.subr.mxu0 0.0
        %2218 = vmatpush1.msra.mxu0 0.0
        %2219 = vmatprep.subr.mxu0 0.0
        %2220 = vmatpush1.msra.mxu0 0.0
        %2221 = vmatprep.subr.mxu0 0.0
        %2222 = vmatpush1.msra.mxu0 0.0
        %2223 = vmatprep.subr.mxu0 0.0
        %2224 = vmatpush1.msra.mxu0 0.0
        %2225 = vmatprep.subr.mxu0 0.0
        %2226 = vmatpush1.msra.mxu0 0.0
        %2227 = vmatprep.subr.mxu0 0.0
        %2228 = vmatpush1.msra.mxu0 0.0
        %2229 = vmatprep.subr.mxu0 0.0
        %2230 = vmatpush1.msra.mxu0 0.0
        %2231 = vmatprep.subr.mxu0 %v387
        %2232 = vmatpush1.msra.mxu0 %v385
        %2233 = vmatprep.subr.mxu0 0.0
        %2234 = vmatpush2.msra.mxu0 0.0
        %2235 = vmatprep.subr.mxu0 0.0
        %2236 = vmatpush2.msra.mxu0 0.0
        %2237 = vmatprep.subr.mxu0 0.0
        %2238 = vmatpush2.msra.mxu0 0.0
        %2239 = vmatprep.subr.mxu0 0.0
        %2240 = vmatpush2.msra.mxu0 0.0
        %2241 = vmatprep.subr.mxu0 0.0
        %2242 = vmatpush2.msra.mxu0 0.0
        %2243 = vmatprep.subr.mxu0 0.0
        %2244 = vmatpush2.msra.mxu0 0.0
        %2245 = vmatprep.subr.mxu0 0.0
        %2246 = vmatpush2.msra.mxu0 0.0
        %2247 = vmatprep.subr.mxu0 0.0
        %2248 = vmatpush2.msra.mxu0 0.0
        %2249 = vmatprep.subr.mxu0 0.0
        %2250 = vmatpush2.msra.mxu0 0.0
        %2251 = vmatprep.subr.mxu0 0.0
        %2252 = vmatpush2.msra.mxu0 0.0
        %2253 = vmatprep.subr.mxu0 0.0
        %2254 = vmatpush2.msra.mxu0 0.0
        %2255 = vmatprep.subr.mxu0 0.0
        %2256 = vmatpush2.msra.mxu0 0.0
        %2257 = vmatprep.subr.mxu0 0.0
        %2258 = vmatpush2.msra.mxu0 0.0
        %2259 = vmatprep.subr.mxu0 0.0
        %2260 = vmatpush2.msra.mxu0 0.0
        %2261 = vmatprep.subr.mxu0 0.0
        %2262 = vmatpush2.msra.mxu0 0.0
        %2263 = vmatprep.subr.mxu0 0.0
        %2264 = vmatpush2.msra.mxu0 0.0
        %2265 = vmatprep.mubr.f32.mxu0 0.0
        %2266 = vmatmul.mubr.f32.gmra.mxu0 %v913
        %v2267 = vpop.f32.mrf.mxu0
        %v2268 = vadd.f32 %v1720, %v2267
        %v2269 = vpop.f32.mrf.mxu0
        %v2270 = vadd.f32 %v1722, %v2269
        %2271 = vdwg.mxu0
        %2272 = vmatprep.subr.mxu0 0.0
        %2273 = vmatpush1.msra.mxu0 0.0
        %2274 = vmatprep.subr.mxu0 0.0
        %2275 = vmatpush1.msra.mxu0 0.0
        %2276 = vmatprep.subr.mxu0 0.0
        %2277 = vmatpush1.msra.mxu0 0.0
        %2278 = vmatprep.subr.mxu0 0.0
        %2279 = vmatpush1.msra.mxu0 0.0
        %2280 = vmatprep.subr.mxu0 0.0
        %2281 = vmatpush1.msra.mxu0 0.0
        %2282 = vmatprep.subr.mxu0 0.0
        %2283 = vmatpush1.msra.mxu0 0.0
        %2284 = vmatprep.subr.mxu0 0.0
        %2285 = vmatpush1.msra.mxu0 0.0
        %2286 = vmatprep.subr.mxu0 0.0
        %2287 = vmatpush1.msra.mxu0 0.0
        %2288 = vmatprep.subr.mxu0 0.0
        %2289 = vmatpush1.msra.mxu0 0.0
        %2290 = vmatprep.subr.mxu0 0.0
        %2291 = vmatpush1.msra.mxu0 0.0
        %2292 = vmatprep.subr.mxu0 0.0
        %2293 = vmatpush1.msra.mxu0 0.0
        %2294 = vmatprep.subr.mxu0 0.0
        %2295 = vmatpush1.msra.mxu0 0.0
        %2296 = vmatprep.subr.mxu0 0.0
        %2297 = vmatpush1.msra.mxu0 0.0
        %2298 = vmatprep.subr.mxu0 0.0
        %2299 = vmatpush1.msra.mxu0 0.0
        %2300 = vmatprep.subr.mxu0 0.0
        %2301 = vmatpush1.msra.mxu0 0.0
        %2302 = vmatprep.subr.mxu0 %v391
        %2303 = vmatpush1.msra.mxu0 %v389
        %2304 = vmatprep.subr.mxu0 0.0
        %2305 = vmatpush2.msra.mxu0 0.0
        %2306 = vmatprep.subr.mxu0 0.0
        %2307 = vmatpush2.msra.mxu0 0.0
        %2308 = vmatprep.subr.mxu0 0.0
        %2309 = vmatpush2.msra.mxu0 0.0
        %2310 = vmatprep.subr.mxu0 0.0
        %2311 = vmatpush2.msra.mxu0 0.0
        %2312 = vmatprep.subr.mxu0 0.0
        %2313 = vmatpush2.msra.mxu0 0.0
        %2314 = vmatprep.subr.mxu0 0.0
        %2315 = vmatpush2.msra.mxu0 0.0
        %2316 = vmatprep.subr.mxu0 0.0
        %2317 = vmatpush2.msra.mxu0 0.0
        %2318 = vmatprep.subr.mxu0 0.0
        %2319 = vmatpush2.msra.mxu0 0.0
        %2320 = vmatprep.subr.mxu0 0.0
        %2321 = vmatpush2.msra.mxu0 0.0
        %2322 = vmatprep.subr.mxu0 0.0
        %2323 = vmatpush2.msra.mxu0 0.0
        %2324 = vmatprep.subr.mxu0 0.0
        %2325 = vmatpush2.msra.mxu0 0.0
        %2326 = vmatprep.subr.mxu0 0.0
        %2327 = vmatpush2.msra.mxu0 0.0
        %2328 = vmatprep.subr.mxu0 0.0
        %2329 = vmatpush2.msra.mxu0 0.0
        %2330 = vmatprep.subr.mxu0 0.0
        %2331 = vmatpush2.msra.mxu0 0.0
        %2332 = vmatprep.subr.mxu0 0.0
        %2333 = vmatpush2.msra.mxu0 0.0
        %2334 = vmatprep.subr.mxu0 0.0
        %2335 = vmatpush2.msra.mxu0 0.0
        %2336 = vmatprep.mubr.f32.mxu0 0.0
        %2337 = vmatmul.mubr.f32.gmra.mxu0 %v913
        %v2338 = vpop.f32.mrf.mxu0
        %v2339 = vadd.f32 %v1791, %v2338
        %v2340 = vpop.f32.mrf.mxu0
        %v2341 = vadd.f32 %v1793, %v2340
        %2342 = vdwg.mxu0
        %2343 = vmatprep.subr.mxu0 0.0
        %2344 = vmatpush1.msra.mxu0 0.0
        %2345 = vmatprep.subr.mxu0 0.0
        %2346 = vmatpush1.msra.mxu0 0.0
        %2347 = vmatprep.subr.mxu0 0.0
        %2348 = vmatpush1.msra.mxu0 0.0
        %2349 = vmatprep.subr.mxu0 0.0
        %2350 = vmatpush1.msra.mxu0 0.0
        %2351 = vmatprep.subr.mxu0 0.0
        %2352 = vmatpush1.msra.mxu0 0.0
        %2353 = vmatprep.subr.mxu0 0.0
        %2354 = vmatpush1.msra.mxu0 0.0
        %2355 = vmatprep.subr.mxu0 0.0
        %2356 = vmatpush1.msra.mxu0 0.0
        %2357 = vmatprep.subr.mxu0 0.0
        %2358 = vmatpush1.msra.mxu0 0.0
        %2359 = vmatprep.subr.mxu0 0.0
        %2360 = vmatpush1.msra.mxu0 0.0
        %2361 = vmatprep.subr.mxu0 0.0
        %2362 = vmatpush1.msra.mxu0 0.0
        %2363 = vmatprep.subr.mxu0 0.0
        %2364 = vmatpush1.msra.mxu0 0.0
        %2365 = vmatprep.subr.mxu0 0.0
        %2366 = vmatpush1.msra.mxu0 0.0
        %2367 = vmatprep.subr.mxu0 0.0
        %2368 = vmatpush1.msra.mxu0 0.0
        %2369 = vmatprep.subr.mxu0 0.0
        %2370 = vmatpush1.msra.mxu0 0.0
        %2371 = vmatprep.subr.mxu0 0.0
        %2372 = vmatpush1.msra.mxu0 0.0
        %2373 = vmatprep.subr.mxu0 %v395
        %2374 = vmatpush1.msra.mxu0 %v393
        %2375 = vmatprep.subr.mxu0 0.0
        %2376 = vmatpush2.msra.mxu0 0.0
        %2377 = vmatprep.subr.mxu0 0.0
        %2378 = vmatpush2.msra.mxu0 0.0
        %2379 = vmatprep.subr.mxu0 0.0
        %2380 = vmatpush2.msra.mxu0 0.0
        %2381 = vmatprep.subr.mxu0 0.0
        %2382 = vmatpush2.msra.mxu0 0.0
        %2383 = vmatprep.subr.mxu0 0.0
        %2384 = vmatpush2.msra.mxu0 0.0
        %2385 = vmatprep.subr.mxu0 0.0
        %2386 = vmatpush2.msra.mxu0 0.0
        %2387 = vmatprep.subr.mxu0 0.0
        %2388 = vmatpush2.msra.mxu0 0.0
        %2389 = vmatprep.subr.mxu0 0.0
        %2390 = vmatpush2.msra.mxu0 0.0
        %2391 = vmatprep.subr.mxu0 0.0
        %2392 = vmatpush2.msra.mxu0 0.0
        %2393 = vmatprep.subr.mxu0 0.0
        %2394 = vmatpush2.msra.mxu0 0.0
        %2395 = vmatprep.subr.mxu0 0.0
        %2396 = vmatpush2.msra.mxu0 0.0
        %2397 = vmatprep.subr.mxu0 0.0
        %2398 = vmatpush2.msra.mxu0 0.0
        %2399 = vmatprep.subr.mxu0 0.0
        %2400 = vmatpush2.msra.mxu0 0.0
        %2401 = vmatprep.subr.mxu0 0.0
        %2402 = vmatpush2.msra.mxu0 0.0
        %2403 = vmatprep.subr.mxu0 0.0
        %2404 = vmatpush2.msra.mxu0 0.0
        %2405 = vmatprep.subr.mxu0 0.0
        %2406 = vmatpush2.msra.mxu0 0.0
        %2407 = vmatprep.mubr.f32.mxu0 0.0
        %2408 = vmatmul.mubr.f32.gmra.mxu0 %v913
        %v2409 = vpop.f32.mrf.mxu0
        %v2410 = vadd.f32 %v1862, %v2409
        %v2411 = vpop.f32.mrf.mxu0
        %v2412 = vadd.f32 %v1864, %v2411
        %2413 = vdwg.mxu0
        %2414 = vmatprep.subr.mxu0 0.0
        %2415 = vmatpush1.msra.mxu0 0.0
        %2416 = vmatprep.subr.mxu0 0.0
        %2417 = vmatpush1.msra.mxu0 0.0
        %2418 = vmatprep.subr.mxu0 0.0
        %2419 = vmatpush1.msra.mxu0 0.0
        %2420 = vmatprep.subr.mxu0 0.0
        %2421 = vmatpush1.msra.mxu0 0.0
        %2422 = vmatprep.subr.mxu0 0.0
        %2423 = vmatpush1.msra.mxu0 0.0
        %2424 = vmatprep.subr.mxu0 0.0
        %2425 = vmatpush1.msra.mxu0 0.0
        %2426 = vmatprep.subr.mxu0 0.0
        %2427 = vmatpush1.msra.mxu0 0.0
        %2428 = vmatprep.subr.mxu0 0.0
        %2429 = vmatpush1.msra.mxu0 0.0
        %2430 = vmatprep.subr.mxu0 0.0
        %2431 = vmatpush1.msra.mxu0 0.0
        %2432 = vmatprep.subr.mxu0 0.0
        %2433 = vmatpush1.msra.mxu0 0.0
        %2434 = vmatprep.subr.mxu0 0.0
        %2435 = vmatpush1.msra.mxu0 0.0
        %2436 = vmatprep.subr.mxu0 0.0
        %2437 = vmatpush1.msra.mxu0 0.0
        %2438 = vmatprep.subr.mxu0 0.0
        %2439 = vmatpush1.msra.mxu0 0.0
        %2440 = vmatprep.subr.mxu0 0.0
        %2441 = vmatpush1.msra.mxu0 0.0
        %2442 = vmatprep.subr.mxu0 0.0
        %2443 = vmatpush1.msra.mxu0 0.0
        %2444 = vmatprep.subr.mxu0 %v399
        %2445 = vmatpush1.msra.mxu0 %v397
        %2446 = vmatprep.subr.mxu0 0.0
        %2447 = vmatpush2.msra.mxu0 0.0
        %2448 = vmatprep.subr.mxu0 0.0
        %2449 = vmatpush2.msra.mxu0 0.0
        %2450 = vmatprep.subr.mxu0 0.0
        %2451 = vmatpush2.msra.mxu0 0.0
        %2452 = vmatprep.subr.mxu0 0.0
        %2453 = vmatpush2.msra.mxu0 0.0
        %2454 = vmatprep.subr.mxu0 0.0
        %2455 = vmatpush2.msra.mxu0 0.0
        %2456 = vmatprep.subr.mxu0 0.0
        %2457 = vmatpush2.msra.mxu0 0.0
        %2458 = vmatprep.subr.mxu0 0.0
        %2459 = vmatpush2.msra.mxu0 0.0
        %2460 = vmatprep.subr.mxu0 0.0
        %2461 = vmatpush2.msra.mxu0 0.0
        %2462 = vmatprep.subr.mxu0 0.0
        %2463 = vmatpush2.msra.mxu0 0.0
        %2464 = vmatprep.subr.mxu0 0.0
        %2465 = vmatpush2.msra.mxu0 0.0
        %2466 = vmatprep.subr.mxu0 0.0
        %2467 = vmatpush2.msra.mxu0 0.0
        %2468 = vmatprep.subr.mxu0 0.0
        %2469 = vmatpush2.msra.mxu0 0.0
        %2470 = vmatprep.subr.mxu0 0.0
        %2471 = vmatpush2.msra.mxu0 0.0
        %2472 = vmatprep.subr.mxu0 0.0
        %2473 = vmatpush2.msra.mxu0 0.0
        %2474 = vmatprep.subr.mxu0 0.0
        %2475 = vmatpush2.msra.mxu0 0.0
        %2476 = vmatprep.subr.mxu0 0.0
        %2477 = vmatpush2.msra.mxu0 0.0
        %2478 = vmatprep.mubr.f32.mxu0 0.0
        %2479 = vmatmul.mubr.f32.gmra.mxu0 %v913
        %v2480 = vpop.f32.mrf.mxu0
        %v2481 = vadd.f32 %v1933, %v2480
        %v2482 = vpop.f32.mrf.mxu0
        %v2483 = vadd.f32 %v1935, %v2482
        %2484 = vdwg.mxu0
        %v2499 = vcombine.low %v2055, %v2057
        %v2500 = vcombine.low %v2126, %v2128
        %v2501 = vcombine.low %v2197, %v2199
        %v2502 = vcombine.low %v2268, %v2270
        %v2503 = vcombine.low %v2339, %v2341
        %v2504 = vcombine.low %v2410, %v2412
        %v2505 = vcombine.low %v2481, %v2483
        %2513 = vst [vmem:[%s333] sm:$0x77] %v2499
        %2514 = vst [vmem:[%s333 + $0x8] sm:$0x77] %v2500
        %2515 = vst [vmem:[%s333 + $0x10] sm:$0x77] %v2501
        %2516 = vst [vmem:[%s333 + $0x18] sm:$0x77] %v2502
        %2517 = vst [vmem:[%s333 + $0x20] sm:$0x77] %v2503
        %2518 = vst [vmem:[%s333 + $0x28] sm:$0x77] %v2504
        %2519 = vst.msk [vmem:[%s333 + $0x30] sm:$0x77] %vm1986, %v2505
        %s2520 = sand.u32 %s145, 1
        %s2521 = scalar_lea.sflag [#allocation4], %s2520
        %s2522 = sand.u32 %s145, 1
        %s2523 = smul.addr %s2522, 56
        %s2524 = scalar_lea.vmem [#allocation9], %s2523
        %s2525 = sand.u32 %s173, 1
        %s2526 = scalar_lea.sflag [#allocation11], %s2525
        %s2527 = sand.u32 %s173, 1
        %s2528 = smul.addr %s2527, 56
        %s2529 = scalar_lea.vmem [#allocation10], %s2528
        // Predicated region
        $region53: #{tpu_custom_call.1} parent=35 // pred_check
          %p2530 = pneg %p155
        $region54: #{tpu_custom_call.1} parent=35 // pred_check_branch
          %2532 = sbr.rel (%p2530) target = $region56
        $region55: #{tpu_custom_call.1} parent=35 // pred_region
          %s2533 = smul.u32 14, %s30
          %s2535 = ssub.s32 896, 896
          %2536 = vsyncadd %s2521, %s2535
          %s2537 = smul.addr %s29, 14
          %s2538 = sadd.s32 %s2533, %s2537
          %s2539 = smul.addr %s2538, 64
          %s2540 = scalar_lea.hbm %s4, %s2539
          %s2542 = sshll.u32 %s2524, 4
          %s2543 = int_to_ptr.vmem [resolvable:$true] %s2542
          %2545 = dma.vmem_to_hbm [thread:$0]  %s2543, 896, %s2540, %s2521
        $region56: #{tpu_custom_call.1} parent=35 // pred_fallthru
          _
        // Predicated region
        $region57: #{tpu_custom_call.1} parent=35 // pred_check
          %p2546 = pneg %p183
        $region58: #{tpu_custom_call.1} parent=35 // pred_check_branch
          %2548 = sbr.rel (%p2546) target = $region60
        $region59: #{tpu_custom_call.1} parent=35 // pred_region
          %s2549 = smul.u32 14, %s30
          %s2551 = ssub.s32 896, 896
          %2552 = vsyncadd %s2526, %s2551
          %s2553 = smul.addr %s29, 14
          %s2554 = sadd.s32 %s2549, %s2553
          %s2555 = smul.addr %s2554, 64
          %s2556 = scalar_lea.hbm %s5, %s2555
          %s2558 = sshll.u32 %s2529, 4
          %s2559 = int_to_ptr.vmem [resolvable:$true] %s2558
          %2561 = dma.vmem_to_hbm [thread:$0]  %s2559, 896, %s2556, %s2526
        $region60: #{tpu_custom_call.1} parent=35 // pred_fallthru
          _
      $region36: #{tpu_custom_call.1} parent=5 // pred_fallthru
        _
      %p2562 = scmp.le.s32.totalorder 2, %s20
      // Predicated region
      $region61: #{tpu_custom_call.1} parent=5 // pred_check
        %p2563 = pneg %p2562
      $region62: #{tpu_custom_call.1} parent=5 // pred_check_branch
        %2565 = sbr.rel (%p2563) target = $region64
      $region63: #{tpu_custom_call.1} parent=5 // pred_region
        %s2566 = ssub.s32 %s20, 2
        // Predicated region
        $region65: #{tpu_custom_call.1} parent=63 // pred_check
          %p2567 = pneg %p161
        $region66: #{tpu_custom_call.1} parent=63 // pred_check_branch
          %2569 = sbr.rel (%p2567) target = $region68
        $region67: #{tpu_custom_call.1} parent=63 // pred_region
          %s2570 = sand.u32 %s146, 1
          %s2571 = scalar_lea.sflag [#allocation4], %s2570
          %s2572 = sand.u32 %s146, 1
          %s2573 = smul.addr %s2572, 56
          %s2574 = scalar_lea.vmem [#allocation9], %s2573
          %2575 = dma.done %s2571, 896
        $region68: #{tpu_custom_call.1} parent=63 // pred_fallthru
          _
        // Predicated region
        $region69: #{tpu_custom_call.1} parent=63 // pred_check
          %p2576 = pneg %p189
        $region70: #{tpu_custom_call.1} parent=63 // pred_check_branch
          %2578 = sbr.rel (%p2576) target = $region72
        $region71: #{tpu_custom_call.1} parent=63 // pred_region
          %s2579 = sand.u32 %s174, 1
          %s2580 = scalar_lea.sflag [#allocation11], %s2579
          %s2581 = sand.u32 %s174, 1
          %s2582 = smul.addr %s2581, 56
          %s2583 = scalar_lea.vmem [#allocation10], %s2582
          %2584 = dma.done %s2580, 896
        $region72: #{tpu_custom_call.1} parent=63 // pred_fallthru
          _
      $region64: #{tpu_custom_call.1} parent=5 // pred_fallthru
        _
    $region6: #{tpu_custom_call.1} parent=1 // loop_footer
      %s24 = sadd.s32 1, %s20
    $region7: #{tpu_custom_call.1} parent=1 // loop_footer_branch
      %19 = sbr.rel target = $region3
    $region8: #{tpu_custom_call.1} parent=1 // loop_exit
      _
    %2585 = vsyncpa [#allocation3], 1
    %s2586 = scalar_lea.sflag [#allocation3], 1
    %2587 = vsyncpa %s2586, 1
    %2588 = vsyncpa [#allocation6], 1
    %2589 = vsyncpa [#allocation4], 1
    %s2590 = scalar_lea.sflag [#allocation4], 1
    %2591 = vsyncpa %s2590, 1
    %2592 = vsyncpa [#allocation11], 1
    %s2593 = scalar_lea.sflag [#allocation11], 1
    %2594 = vsyncpa %s2593, 1

</llo_original>
